<compile_context>
chip_gen: v6e
topology: v6e:2x2x1
jax: 0.10.0
libtpu: 0.0.40
codegen_flags: <defaults>
</compile_context>

<pallas_src>
import jax
import jax.numpy as jnp
from jax.experimental import pallas as pl
from jax.experimental.pallas import tpu as pltpu


def se_gate_conv1x1_kernel(gate_ref, w_ref, x_ref, o_ref):
    # gate_ref: [1, C_in], w_ref: [C_out, C_in], x_ref: [C_in, HW], o_ref: [C_out, HW]
    g = jax.nn.sigmoid(gate_ref[...])                 # [1, C_in]   (EUP)
    w_gated = w_ref[...] * g                          # sublane broadcast over C_out rows
    o_ref[...] = jnp.dot(
        w_gated, x_ref[...], preferred_element_type=jnp.float32
    ).astype(o_ref.dtype)


def se_gate_conv1x1(x_nchw, gate_nc11, w_oihw):
    """conv2d_1x1(sigmoid(gate) * x), no bias, stride 1.

    x_nchw:    [1, C_in, H, W]     float32
    gate_nc11: [1, C_in, 1, 1]     float32
    w_oihw:    [C_out, C_in, 1, 1] float32
    returns    [1, C_out, H, W]    float32
    """
    n, c_in, h, w = x_nchw.shape
    assert n == 1, "kernel written for batch=1 (as in the reference module)"
    c_out = w_oihw.shape[0]
    hw = h * w

    # All three are pure metadata reshapes of contiguous row-major arrays.
    x2d = x_nchw.reshape(c_in, hw)          # [C_in, HW]
    gate2d = gate_nc11.reshape(1, c_in)     # [1, C_in]
    w2d = w_oihw.reshape(c_out, c_in)       # [C_out, C_in]

    vmem = pl.BlockSpec(memory_space=pltpu.MemorySpace.VMEM)

    out2d = pl.pallas_call(
        se_gate_conv1x1_kernel,
        out_shape=jax.ShapeDtypeStruct((c_out, hw), x_nchw.dtype),
        in_specs=[vmem, vmem, vmem],
        out_specs=vmem,
    )(gate2d, w2d, x2d)

    # Pure reshape back to NCHW.
    return out2d.reshape(1, c_out, h, w)


if __name__ == "__main__":
    key = jax.random.PRNGKey(0)
    k1, k2, k3 = jax.random.split(key, 3)

    # Shapes from the reference module: Conv2d(1056, 176, 1x1), 14x14 feature map.
    C_IN, C_OUT, H, W = 1056, 176, 14, 14

    x374 = jax.random.normal(k1, (1, C_IN, H, W), dtype=jnp.float32)   # feature map
    x378 = jax.random.normal(k2, (1, C_IN, 1, 1), dtype=jnp.float32)   # SE gate logits
    w = jax.random.normal(k3, (C_OUT, C_IN, 1, 1), dtype=jnp.float32) * 0.02

    out = se_gate_conv1x1(x374, x378, w)
    out = jax.block_until_ready(out)

    # Reference in plain JAX (same math as the PyTorch module).
    gated_ref = jax.nn.sigmoid(x378) * x374                                # [1, C_in, H, W]
    ref = jnp.einsum("oi,nihw->nohw", w.reshape(C_OUT, C_IN), gated_ref)   # 1x1 conv
    assert out.shape == (1, C_OUT, H, W)
    assert jnp.allclose(out, ref, atol=1e-2, rtol=1e-2), "mismatch vs reference"

    print("KERNEL_OK")
</pallas_src>

<mosaic_0001>
module attributes {stable_mosaic.version = 11 : i64} {
  func.func @se_gate_conv1x1_kernel(%arg0: memref<1x1056xf32, #tpu.memory_space<vmem>>, %arg1: memref<176x1056xf32, #tpu.memory_space<vmem>>, %arg2: memref<1056x196xf32, #tpu.memory_space<vmem>>, %arg3: memref<176x196xf32, #tpu.memory_space<vmem>>) attributes {dimension_semantics = [], scalar_prefetch = 0 : i64, scratch_operands = 0 : i64, tpu.core_type = #tpu.core_type<tc>} {
    %c0 = arith.constant 0 : index
    %c0_0 = arith.constant 0 : index
    %0 = vector.load %arg0[%c0, %c0_0] : memref<1x1056xf32, #tpu.memory_space<vmem>>, vector<1x1056xf32>
    %1 = arith.negf %0 : vector<1x1056xf32>
    %2 = math.exp %1 : vector<1x1056xf32>
    %cst = arith.constant 1.000000e+00 : f32
    %3 = vector.broadcast %cst : f32 to vector<1x1056xf32>
    %4 = arith.addf %3, %2 : vector<1x1056xf32>
    %5 = arith.divf %3, %4 : vector<1x1056xf32>
    %c0_1 = arith.constant 0 : index
    %c0_2 = arith.constant 0 : index
    %6 = vector.load %arg1[%c0_1, %c0_2] : memref<176x1056xf32, #tpu.memory_space<vmem>>, vector<176x1056xf32>
    %7 = vector.broadcast %5 : vector<1x1056xf32> to vector<176x1056xf32>
    %8 = arith.mulf %6, %7 : vector<176x1056xf32>
    %c0_3 = arith.constant 0 : index
    %c0_4 = arith.constant 0 : index
    %9 = vector.load %arg2[%c0_3, %c0_4] : memref<1056x196xf32, #tpu.memory_space<vmem>>, vector<1056x196xf32>
    %cst_5 = arith.constant dense<0.000000e+00> : vector<176x196xf32>
    %10 = tpu.matmul %8, %9, %cst_5 {dimension_numbers = #tpu.dot_dimension_numbers<[1], [0], [0], [1], [0, 0, 1, 1], [], []>} : vector<176x1056xf32>, vector<1056x196xf32>, vector<176x196xf32> -> vector<176x196xf32>
    %c0_6 = arith.constant 0 : index
    %c0_7 = arith.constant 0 : index
    %11 = vector.load %arg3[%c0_6, %c0_7] : memref<176x196xf32, #tpu.memory_space<vmem>>, vector<176x196xf32>
    tpu.vector_store %arg3[%c0_6, %c0_7], %10 {strides = array<i32>} : memref<176x196xf32, #tpu.memory_space<vmem>>, vector<176x196xf32>,
    return
  }
}

</mosaic_0001>

<llo_original>
// kernel: tpu_custom_call.1
$region0: #{tpu_custom_call.1}
  #allocation0 [shape = 'u32[]', space=smem, size = 0x4, offset = 0x4, fixed_abs, tag = 'smem constant byte address 0x4 - core index']
  #allocation1 [shape = 'u32[144,128]{1,0:T(1,128)}', space=vmem, size = 0x12000, scoped, tag = 'internal scratch']
  %s0 = inlined_call_operand.vmem [shape: f32[1,1056], index: 0, kind: input, shape index: {}]
  %s1 = inlined_call_operand.vmem [shape: f32[176,1056], index: 1, kind: input, shape index: {}]
  %s2 = inlined_call_operand.vmem [shape: f32[1056,196], index: 2, kind: input, shape index: {}]
  %s3 = inlined_call_operand.hbm [shape: f32[176,196], index: 3, kind: output, shape index: {}]
  %s4 = sld [smem:[#allocation0]]
  $region22: #{tpu_custom_call.1} parent=0
    _
  %s6 = ssub.s32 1, %s4
  %s7 = scalar_select 0, %s6, %s4
  $region1: #{tpu_custom_call.1} parent=0
    #allocation2 [shape = 'u8[180224]{0}', space=vmem, size = 0x2c000, scoped, tag = 'output window, operand 0, single buffered']
    #allocation3 [shape = 's32[1]{0}', space=sflag, size = 0x4, scoped, tag = 'scoped memory for tpu_custom_call.1']
    %8 = vsyncpa [#allocation3], 0
    // Predicated region
    $region2: #{tpu_custom_call.1} parent=1 // pred_check
      _
    $region3: #{tpu_custom_call.1} parent=1 // pred_check_branch
      %10 = sbr.rel (0) target = $region5
    $region4: #{tpu_custom_call.1} parent=1 // pred_region
      _
    $region5: #{tpu_custom_call.1} parent=1 // pred_fallthru
      _
    // Predicated region
    $region6: #{tpu_custom_call.1} parent=1 // pred_check
      _
    $region7: #{tpu_custom_call.1} parent=1 // pred_check_branch
      %12 = sbr.rel (0) target = $region9
    $region8: #{tpu_custom_call.1} parent=1 // pred_region
      _
    $region9: #{tpu_custom_call.1} parent=1 // pred_fallthru
      _
    // Predicated region
    $region10: #{tpu_custom_call.1} parent=1 // pred_check
      _
    $region11: #{tpu_custom_call.1} parent=1 // pred_check_branch
      %14 = sbr.rel (0) target = $region13
    $region12: #{tpu_custom_call.1} parent=1 // pred_region
      _
    $region13: #{tpu_custom_call.1} parent=1 // pred_fallthru
      _
    %v15 = vld [vmem:[%s0] sm:$0xff]
    %v16 = vld [vmem:[%s0 + $0x8] sm:$0x1]
    %v17 = vxor.u32 %v15, 2147483648
    %v18 = vxor.u32 %v16, 2147483648
    %v19 = vmul.f32 %v17, 1.442695
    %v20 = vpow.pop %v19
    %v21 = vmul.f32 %v18, 1.442695
    %v22 = vpow.pop %v21
    %v23 = vadd.f32 %v20, 1.0
    %v24 = vadd.f32 %v22, 1.0
    %v25 = vrcp.pop %v23
    %v26 = vmul.f32 1.0, %v25
    %v27 = vrcp.pop %v24
    %v28 = vmul.f32 1.0, %v27
    %v29 = vld [vmem:[%s1] sm:$0xff]
    %v30 = vld [vmem:[%s1 + $0x8] sm:$0xff]
    %v31 = vld [vmem:[%s1 + $0x10] sm:$0xff]
    %v32 = vld [vmem:[%s1 + $0x18] sm:$0xff]
    %v33 = vld [vmem:[%s1 + $0x20] sm:$0xff]
    %v34 = vld [vmem:[%s1 + $0x28] sm:$0xff]
    %v35 = vld [vmem:[%s1 + $0x30] sm:$0xff]
    %v36 = vld [vmem:[%s1 + $0x38] sm:$0xff]
    %v37 = vld [vmem:[%s1 + $0x40] sm:$0xff]
    %v38 = vld [vmem:[%s1 + $0x48] sm:$0xff]
    %v39 = vld [vmem:[%s1 + $0x50] sm:$0xff]
    %v40 = vld [vmem:[%s1 + $0x58] sm:$0xff]
    %v41 = vld [vmem:[%s1 + $0x60] sm:$0xff]
    %v42 = vld [vmem:[%s1 + $0x68] sm:$0xff]
    %v43 = vld [vmem:[%s1 + $0x70] sm:$0xff]
    %v44 = vld [vmem:[%s1 + $0x78] sm:$0xff]
    %v45 = vld [vmem:[%s1 + $0x80] sm:$0xff]
    %v46 = vld [vmem:[%s1 + $0x88] sm:$0xff]
    %v47 = vld [vmem:[%s1 + $0x90] sm:$0xff]
    %v48 = vld [vmem:[%s1 + $0x98] sm:$0xff]
    %v49 = vld [vmem:[%s1 + $0xa0] sm:$0xff]
    %v50 = vld [vmem:[%s1 + $0xa8] sm:$0xff]
    %v51 = vld [vmem:[%s1 + $0xb0] sm:$0xff]
    %v52 = vld [vmem:[%s1 + $0xb8] sm:$0xff]
    %v53 = vld [vmem:[%s1 + $0xc0] sm:$0xff]
    %v54 = vld [vmem:[%s1 + $0xc8] sm:$0xff]
    %v55 = vld [vmem:[%s1 + $0xd0] sm:$0xff]
    %v56 = vld [vmem:[%s1 + $0xd8] sm:$0xff]
    %v57 = vld [vmem:[%s1 + $0xe0] sm:$0xff]
    %v58 = vld [vmem:[%s1 + $0xe8] sm:$0xff]
    %v59 = vld [vmem:[%s1 + $0xf0] sm:$0xff]
    %v60 = vld [vmem:[%s1 + $0xf8] sm:$0xff]
    %v61 = vld [vmem:[%s1 + $0x100] sm:$0xff]
    %v62 = vld [vmem:[%s1 + $0x108] sm:$0xff]
    %v63 = vld [vmem:[%s1 + $0x110] sm:$0xff]
    %v64 = vld [vmem:[%s1 + $0x118] sm:$0xff]
    %v65 = vld [vmem:[%s1 + $0x120] sm:$0xff]
    %v66 = vld [vmem:[%s1 + $0x128] sm:$0xff]
    %v67 = vld [vmem:[%s1 + $0x130] sm:$0xff]
    %v68 = vld [vmem:[%s1 + $0x138] sm:$0xff]
    %v69 = vld [vmem:[%s1 + $0x140] sm:$0xff]
    %v70 = vld [vmem:[%s1 + $0x148] sm:$0xff]
    %v71 = vld [vmem:[%s1 + $0x150] sm:$0xff]
    %v72 = vld [vmem:[%s1 + $0x158] sm:$0xff]
    %v73 = vld [vmem:[%s1 + $0x160] sm:$0xff]
    %v74 = vld [vmem:[%s1 + $0x168] sm:$0xff]
    %v75 = vld [vmem:[%s1 + $0x170] sm:$0xff]
    %v76 = vld [vmem:[%s1 + $0x178] sm:$0xff]
    %v77 = vld [vmem:[%s1 + $0x180] sm:$0xff]
    %v78 = vld [vmem:[%s1 + $0x188] sm:$0xff]
    %v79 = vld [vmem:[%s1 + $0x190] sm:$0xff]
    %v80 = vld [vmem:[%s1 + $0x198] sm:$0xff]
    %v81 = vld [vmem:[%s1 + $0x1a0] sm:$0xff]
    %v82 = vld [vmem:[%s1 + $0x1a8] sm:$0xff]
    %v83 = vld [vmem:[%s1 + $0x1b0] sm:$0xff]
    %v84 = vld [vmem:[%s1 + $0x1b8] sm:$0xff]
    %v85 = vld [vmem:[%s1 + $0x1c0] sm:$0xff]
    %v86 = vld [vmem:[%s1 + $0x1c8] sm:$0xff]
    %v87 = vld [vmem:[%s1 + $0x1d0] sm:$0xff]
    %v88 = vld [vmem:[%s1 + $0x1d8] sm:$0xff]
    %v89 = vld [vmem:[%s1 + $0x1e0] sm:$0xff]
    %v90 = vld [vmem:[%s1 + $0x1e8] sm:$0xff]
    %v91 = vld [vmem:[%s1 + $0x1f0] sm:$0xff]
    %v92 = vld [vmem:[%s1 + $0x1f8] sm:$0xff]
    %v93 = vld [vmem:[%s1 + $0x200] sm:$0xff]
    %v94 = vld [vmem:[%s1 + $0x208] sm:$0xff]
    %v95 = vld [vmem:[%s1 + $0x210] sm:$0xff]
    %v96 = vld [vmem:[%s1 + $0x218] sm:$0xff]
    %v97 = vld [vmem:[%s1 + $0x220] sm:$0xff]
    %v98 = vld [vmem:[%s1 + $0x228] sm:$0xff]
    %v99 = vld [vmem:[%s1 + $0x230] sm:$0xff]
    %v100 = vld [vmem:[%s1 + $0x238] sm:$0xff]
    %v101 = vld [vmem:[%s1 + $0x240] sm:$0xff]
    %v102 = vld [vmem:[%s1 + $0x248] sm:$0xff]
    %v103 = vld [vmem:[%s1 + $0x250] sm:$0xff]
    %v104 = vld [vmem:[%s1 + $0x258] sm:$0xff]
    %v105 = vld [vmem:[%s1 + $0x260] sm:$0xff]
    %v106 = vld [vmem:[%s1 + $0x268] sm:$0xff]
    %v107 = vld [vmem:[%s1 + $0x270] sm:$0xff]
    %v108 = vld [vmem:[%s1 + $0x278] sm:$0xff]
    %v109 = vld [vmem:[%s1 + $0x280] sm:$0xff]
    %v110 = vld [vmem:[%s1 + $0x288] sm:$0xff]
    %v111 = vld [vmem:[%s1 + $0x290] sm:$0xff]
    %v112 = vld [vmem:[%s1 + $0x298] sm:$0xff]
    %v113 = vld [vmem:[%s1 + $0x2a0] sm:$0xff]
    %v114 = vld [vmem:[%s1 + $0x2a8] sm:$0xff]
    %v115 = vld [vmem:[%s1 + $0x2b0] sm:$0xff]
    %v116 = vld [vmem:[%s1 + $0x2b8] sm:$0xff]
    %v117 = vld [vmem:[%s1 + $0x2c0] sm:$0xff]
    %v118 = vld [vmem:[%s1 + $0x2c8] sm:$0xff]
    %v119 = vld [vmem:[%s1 + $0x2d0] sm:$0xff]
    %v120 = vld [vmem:[%s1 + $0x2d8] sm:$0xff]
    %v121 = vld [vmem:[%s1 + $0x2e0] sm:$0xff]
    %v122 = vld [vmem:[%s1 + $0x2e8] sm:$0xff]
    %v123 = vld [vmem:[%s1 + $0x2f0] sm:$0xff]
    %v124 = vld [vmem:[%s1 + $0x2f8] sm:$0xff]
    %v125 = vld [vmem:[%s1 + $0x300] sm:$0xff]
    %v126 = vld [vmem:[%s1 + $0x308] sm:$0xff]
    %v127 = vld [vmem:[%s1 + $0x310] sm:$0xff]
    %v128 = vld [vmem:[%s1 + $0x318] sm:$0xff]
    %v129 = vld [vmem:[%s1 + $0x320] sm:$0xff]
    %v130 = vld [vmem:[%s1 + $0x328] sm:$0xff]
    %v131 = vld [vmem:[%s1 + $0x330] sm:$0xff]
    %v132 = vld [vmem:[%s1 + $0x338] sm:$0xff]
    %v133 = vld [vmem:[%s1 + $0x340] sm:$0xff]
    %v134 = vld [vmem:[%s1 + $0x348] sm:$0xff]
    %v135 = vld [vmem:[%s1 + $0x350] sm:$0xff]
    %v136 = vld [vmem:[%s1 + $0x358] sm:$0xff]
    %v137 = vld [vmem:[%s1 + $0x360] sm:$0xff]
    %v138 = vld [vmem:[%s1 + $0x368] sm:$0xff]
    %v139 = vld [vmem:[%s1 + $0x370] sm:$0xff]
    %v140 = vld [vmem:[%s1 + $0x378] sm:$0xff]
    %v141 = vld [vmem:[%s1 + $0x380] sm:$0xff]
    %v142 = vld [vmem:[%s1 + $0x388] sm:$0xff]
    %v143 = vld [vmem:[%s1 + $0x390] sm:$0xff]
    %v144 = vld [vmem:[%s1 + $0x398] sm:$0xff]
    %v145 = vld [vmem:[%s1 + $0x3a0] sm:$0xff]
    %v146 = vld [vmem:[%s1 + $0x3a8] sm:$0xff]
    %v147 = vld [vmem:[%s1 + $0x3b0] sm:$0xff]
    %v148 = vld [vmem:[%s1 + $0x3b8] sm:$0xff]
    %v149 = vld [vmem:[%s1 + $0x3c0] sm:$0xff]
    %v150 = vld [vmem:[%s1 + $0x3c8] sm:$0xff]
    %v151 = vld [vmem:[%s1 + $0x3d0] sm:$0xff]
    %v152 = vld [vmem:[%s1 + $0x3d8] sm:$0xff]
    %v153 = vld [vmem:[%s1 + $0x3e0] sm:$0xff]
    %v154 = vld [vmem:[%s1 + $0x3e8] sm:$0xff]
    %v155 = vld [vmem:[%s1 + $0x3f0] sm:$0xff]
    %v156 = vld [vmem:[%s1 + $0x3f8] sm:$0xff]
    %v157 = vld [vmem:[%s1 + $0x400] sm:$0xff]
    %v158 = vld [vmem:[%s1 + $0x408] sm:$0xff]
    %v159 = vld [vmem:[%s1 + $0x410] sm:$0xff]
    %v160 = vld [vmem:[%s1 + $0x418] sm:$0xff]
    %v161 = vld [vmem:[%s1 + $0x420] sm:$0xff]
    %v162 = vld [vmem:[%s1 + $0x428] sm:$0xff]
    %v163 = vld [vmem:[%s1 + $0x430] sm:$0xff]
    %v164 = vld [vmem:[%s1 + $0x438] sm:$0xff]
    %v165 = vld [vmem:[%s1 + $0x440] sm:$0xff]
    %v166 = vld [vmem:[%s1 + $0x448] sm:$0xff]
    %v167 = vld [vmem:[%s1 + $0x450] sm:$0xff]
    %v168 = vld [vmem:[%s1 + $0x458] sm:$0xff]
    %v169 = vld [vmem:[%s1 + $0x460] sm:$0xff]
    %v170 = vld [vmem:[%s1 + $0x468] sm:$0xff]
    %v171 = vld [vmem:[%s1 + $0x470] sm:$0xff]
    %v172 = vld [vmem:[%s1 + $0x478] sm:$0xff]
    %v173 = vld [vmem:[%s1 + $0x480] sm:$0xff]
    %v174 = vld [vmem:[%s1 + $0x488] sm:$0xff]
    %v175 = vld [vmem:[%s1 + $0x490] sm:$0xff]
    %v176 = vld [vmem:[%s1 + $0x498] sm:$0xff]
    %v177 = vld [vmem:[%s1 + $0x4a0] sm:$0xff]
    %v178 = vld [vmem:[%s1 + $0x4a8] sm:$0xff]
    %v179 = vld [vmem:[%s1 + $0x4b0] sm:$0xff]
    %v180 = vld [vmem:[%s1 + $0x4b8] sm:$0xff]
    %v181 = vld [vmem:[%s1 + $0x4c0] sm:$0xff]
    %v182 = vld [vmem:[%s1 + $0x4c8] sm:$0xff]
    %v183 = vld [vmem:[%s1 + $0x4d0] sm:$0xff]
    %v184 = vld [vmem:[%s1 + $0x4d8] sm:$0xff]
    %v185 = vld [vmem:[%s1 + $0x4e0] sm:$0xff]
    %v186 = vld [vmem:[%s1 + $0x4e8] sm:$0xff]
    %v187 = vld [vmem:[%s1 + $0x4f0] sm:$0xff]
    %v188 = vld [vmem:[%s1 + $0x4f8] sm:$0xff]
    %v189 = vld [vmem:[%s1 + $0x500] sm:$0xff]
    %v190 = vld [vmem:[%s1 + $0x508] sm:$0xff]
    %v191 = vld [vmem:[%s1 + $0x510] sm:$0xff]
    %v192 = vld [vmem:[%s1 + $0x518] sm:$0xff]
    %v193 = vld [vmem:[%s1 + $0x520] sm:$0xff]
    %v194 = vld [vmem:[%s1 + $0x528] sm:$0xff]
    %v195 = vld [vmem:[%s1 + $0x530] sm:$0xff]
    %v196 = vld [vmem:[%s1 + $0x538] sm:$0xff]
    %v197 = vld [vmem:[%s1 + $0x540] sm:$0xff]
    %v198 = vld [vmem:[%s1 + $0x548] sm:$0xff]
    %v199 = vld [vmem:[%s1 + $0x550] sm:$0xff]
    %v200 = vld [vmem:[%s1 + $0x558] sm:$0xff]
    %v201 = vld [vmem:[%s1 + $0x560] sm:$0xff]
    %v202 = vld [vmem:[%s1 + $0x568] sm:$0xff]
    %v203 = vld [vmem:[%s1 + $0x570] sm:$0xff]
    %v204 = vld [vmem:[%s1 + $0x578] sm:$0xff]
    %v205 = vld [vmem:[%s1 + $0x580] sm:$0xff]
    %v206 = vld [vmem:[%s1 + $0x588] sm:$0xff]
    %v207 = vld [vmem:[%s1 + $0x590] sm:$0xff]
    %v208 = vld [vmem:[%s1 + $0x598] sm:$0xff]
    %v209 = vld [vmem:[%s1 + $0x5a0] sm:$0xff]
    %v210 = vld [vmem:[%s1 + $0x5a8] sm:$0xff]
    %v211 = vld [vmem:[%s1 + $0x5b0] sm:$0xff]
    %v212 = vld [vmem:[%s1 + $0x5b8] sm:$0xff]
    %v213 = vld [vmem:[%s1 + $0x5c0] sm:$0xff]
    %v214 = vld [vmem:[%s1 + $0x5c8] sm:$0xff]
    %v215 = vld [vmem:[%s1 + $0x5d0] sm:$0xff]
    %v216 = vld [vmem:[%s1 + $0x5d8] sm:$0xff]
    %v217 = vld [vmem:[%s1 + $0x5e0] sm:$0xff]
    %v218 = vld [vmem:[%s1 + $0x5e8] sm:$0xff]
    %v219 = vld [vmem:[%s1 + $0x5f0] sm:$0xff]
    %v220 = vld [vmem:[%s1 + $0x5f8] sm:$0xff]
    %v221 = vld [vmem:[%s1 + $0x600] sm:$0xff]
    %v222 = vld [vmem:[%s1 + $0x608] sm:$0xff]
    %v223 = vld [vmem:[%s1 + $0x610] sm:$0xff]
    %v224 = vld [vmem:[%s1 + $0x618] sm:$0xff]
    %v225 = vld [vmem:[%s1 + $0x620] sm:$0xff]
    %v226 = vld [vmem:[%s1 + $0x628] sm:$0xff]
    %v229 = vlaneseq
    %v230 = vshrl.u32 %v229, 7
    %v231 = vsub.s32 0, %v230
    %v232 = vrot.slane %v26, %v231
    %v233 = vlaneseq
    %v234 = vshrl.u32 %v233, 7
    %v235 = vsub.s32 1, %v234
    %v236 = vrot.slane %v26, %v235
    %v237 = vlaneseq
    %v238 = vshrl.u32 %v237, 7
    %v239 = vsub.s32 2, %v238
    %v240 = vrot.slane %v26, %v239
    %v241 = vlaneseq
    %v242 = vshrl.u32 %v241, 7
    %v243 = vsub.s32 3, %v242
    %v244 = vrot.slane %v26, %v243
    %v245 = vlaneseq
    %v246 = vshrl.u32 %v245, 7
    %v247 = vsub.s32 4, %v246
    %v248 = vrot.slane %v26, %v247
    %v249 = vlaneseq
    %v250 = vshrl.u32 %v249, 7
    %v251 = vsub.s32 5, %v250
    %v252 = vrot.slane %v26, %v251
    %v253 = vlaneseq
    %v254 = vshrl.u32 %v253, 7
    %v255 = vsub.s32 6, %v254
    %v256 = vrot.slane %v26, %v255
    %v257 = vlaneseq
    %v258 = vshrl.u32 %v257, 7
    %v259 = vsub.s32 7, %v258
    %v260 = vrot.slane %v26, %v259
    %v261 = vlaneseq
    %v262 = vshrl.u32 %v261, 7
    %v263 = vsub.s32 0, %v262
    %v264 = vrot.slane %v28, %v263
    %v274 = vmul.f32 %v29, %v232
    %v275 = vmul.f32 %v30, %v236
    %v276 = vmul.f32 %v31, %v240
    %v277 = vmul.f32 %v32, %v244
    %v278 = vmul.f32 %v33, %v248
    %v279 = vmul.f32 %v34, %v252
    %v280 = vmul.f32 %v35, %v256
    %v281 = vmul.f32 %v36, %v260
    %v282 = vmul.f32 %v37, %v264
    %v283 = vmul.f32 %v38, %v232
    %v284 = vmul.f32 %v39, %v236
    %v285 = vmul.f32 %v40, %v240
    %v286 = vmul.f32 %v41, %v244
    %v287 = vmul.f32 %v42, %v248
    %v288 = vmul.f32 %v43, %v252
    %v289 = vmul.f32 %v44, %v256
    %v290 = vmul.f32 %v45, %v260
    %v291 = vmul.f32 %v46, %v264
    %v292 = vmul.f32 %v47, %v232
    %v293 = vmul.f32 %v48, %v236
    %v294 = vmul.f32 %v49, %v240
    %v295 = vmul.f32 %v50, %v244
    %v296 = vmul.f32 %v51, %v248
    %v297 = vmul.f32 %v52, %v252
    %v298 = vmul.f32 %v53, %v256
    %v299 = vmul.f32 %v54, %v260
    %v300 = vmul.f32 %v55, %v264
    %v301 = vmul.f32 %v56, %v232
    %v302 = vmul.f32 %v57, %v236
    %v303 = vmul.f32 %v58, %v240
    %v304 = vmul.f32 %v59, %v244
    %v305 = vmul.f32 %v60, %v248
    %v306 = vmul.f32 %v61, %v252
    %v307 = vmul.f32 %v62, %v256
    %v308 = vmul.f32 %v63, %v260
    %v309 = vmul.f32 %v64, %v264
    %v310 = vmul.f32 %v65, %v232
    %v311 = vmul.f32 %v66, %v236
    %v312 = vmul.f32 %v67, %v240
    %v313 = vmul.f32 %v68, %v244
    %v314 = vmul.f32 %v69, %v248
    %v315 = vmul.f32 %v70, %v252
    %v316 = vmul.f32 %v71, %v256
    %v317 = vmul.f32 %v72, %v260
    %v318 = vmul.f32 %v73, %v264
    %v319 = vmul.f32 %v74, %v232
    %v320 = vmul.f32 %v75, %v236
    %v321 = vmul.f32 %v76, %v240
    %v322 = vmul.f32 %v77, %v244
    %v323 = vmul.f32 %v78, %v248
    %v324 = vmul.f32 %v79, %v252
    %v325 = vmul.f32 %v80, %v256
    %v326 = vmul.f32 %v81, %v260
    %v327 = vmul.f32 %v82, %v264
    %v328 = vmul.f32 %v83, %v232
    %v329 = vmul.f32 %v84, %v236
    %v330 = vmul.f32 %v85, %v240
    %v331 = vmul.f32 %v86, %v244
    %v332 = vmul.f32 %v87, %v248
    %v333 = vmul.f32 %v88, %v252
    %v334 = vmul.f32 %v89, %v256
    %v335 = vmul.f32 %v90, %v260
    %v336 = vmul.f32 %v91, %v264
    %v337 = vmul.f32 %v92, %v232
    %v338 = vmul.f32 %v93, %v236
    %v339 = vmul.f32 %v94, %v240
    %v340 = vmul.f32 %v95, %v244
    %v341 = vmul.f32 %v96, %v248
    %v342 = vmul.f32 %v97, %v252
    %v343 = vmul.f32 %v98, %v256
    %v344 = vmul.f32 %v99, %v260
    %v345 = vmul.f32 %v100, %v264
    %v346 = vmul.f32 %v101, %v232
    %v347 = vmul.f32 %v102, %v236
    %v348 = vmul.f32 %v103, %v240
    %v349 = vmul.f32 %v104, %v244
    %v350 = vmul.f32 %v105, %v248
    %v351 = vmul.f32 %v106, %v252
    %v352 = vmul.f32 %v107, %v256
    %v353 = vmul.f32 %v108, %v260
    %v354 = vmul.f32 %v109, %v264
    %v355 = vmul.f32 %v110, %v232
    %v356 = vmul.f32 %v111, %v236
    %v357 = vmul.f32 %v112, %v240
    %v358 = vmul.f32 %v113, %v244
    %v359 = vmul.f32 %v114, %v248
    %v360 = vmul.f32 %v115, %v252
    %v361 = vmul.f32 %v116, %v256
    %v362 = vmul.f32 %v117, %v260
    %v363 = vmul.f32 %v118, %v264
    %v364 = vmul.f32 %v119, %v232
    %v365 = vmul.f32 %v120, %v236
    %v366 = vmul.f32 %v121, %v240
    %v367 = vmul.f32 %v122, %v244
    %v368 = vmul.f32 %v123, %v248
    %v369 = vmul.f32 %v124, %v252
    %v370 = vmul.f32 %v125, %v256
    %v371 = vmul.f32 %v126, %v260
    %v372 = vmul.f32 %v127, %v264
    %v373 = vmul.f32 %v128, %v232
    %v374 = vmul.f32 %v129, %v236
    %v375 = vmul.f32 %v130, %v240
    %v376 = vmul.f32 %v131, %v244
    %v377 = vmul.f32 %v132, %v248
    %v378 = vmul.f32 %v133, %v252
    %v379 = vmul.f32 %v134, %v256
    %v380 = vmul.f32 %v135, %v260
    %v381 = vmul.f32 %v136, %v264
    %v382 = vmul.f32 %v137, %v232
    %v383 = vmul.f32 %v138, %v236
    %v384 = vmul.f32 %v139, %v240
    %v385 = vmul.f32 %v140, %v244
    %v386 = vmul.f32 %v141, %v248
    %v387 = vmul.f32 %v142, %v252
    %v388 = vmul.f32 %v143, %v256
    %v389 = vmul.f32 %v144, %v260
    %v390 = vmul.f32 %v145, %v264
    %v391 = vmul.f32 %v146, %v232
    %v392 = vmul.f32 %v147, %v236
    %v393 = vmul.f32 %v148, %v240
    %v394 = vmul.f32 %v149, %v244
    %v395 = vmul.f32 %v150, %v248
    %v396 = vmul.f32 %v151, %v252
    %v397 = vmul.f32 %v152, %v256
    %v398 = vmul.f32 %v153, %v260
    %v399 = vmul.f32 %v154, %v264
    %v400 = vmul.f32 %v155, %v232
    %v401 = vmul.f32 %v156, %v236
    %v402 = vmul.f32 %v157, %v240
    %v403 = vmul.f32 %v158, %v244
    %v404 = vmul.f32 %v159, %v248
    %v405 = vmul.f32 %v160, %v252
    %v406 = vmul.f32 %v161, %v256
    %v407 = vmul.f32 %v162, %v260
    %v408 = vmul.f32 %v163, %v264
    %v409 = vmul.f32 %v164, %v232
    %v410 = vmul.f32 %v165, %v236
    %v411 = vmul.f32 %v166, %v240
    %v412 = vmul.f32 %v167, %v244
    %v413 = vmul.f32 %v168, %v248
    %v414 = vmul.f32 %v169, %v252
    %v415 = vmul.f32 %v170, %v256
    %v416 = vmul.f32 %v171, %v260
    %v417 = vmul.f32 %v172, %v264
    %v418 = vmul.f32 %v173, %v232
    %v419 = vmul.f32 %v174, %v236
    %v420 = vmul.f32 %v175, %v240
    %v421 = vmul.f32 %v176, %v244
    %v422 = vmul.f32 %v177, %v248
    %v423 = vmul.f32 %v178, %v252
    %v424 = vmul.f32 %v179, %v256
    %v425 = vmul.f32 %v180, %v260
    %v426 = vmul.f32 %v181, %v264
    %v427 = vmul.f32 %v182, %v232
    %v428 = vmul.f32 %v183, %v236
    %v429 = vmul.f32 %v184, %v240
    %v430 = vmul.f32 %v185, %v244
    %v431 = vmul.f32 %v186, %v248
    %v432 = vmul.f32 %v187, %v252
    %v433 = vmul.f32 %v188, %v256
    %v434 = vmul.f32 %v189, %v260
    %v435 = vmul.f32 %v190, %v264
    %v436 = vmul.f32 %v191, %v232
    %v437 = vmul.f32 %v192, %v236
    %v438 = vmul.f32 %v193, %v240
    %v439 = vmul.f32 %v194, %v244
    %v440 = vmul.f32 %v195, %v248
    %v441 = vmul.f32 %v196, %v252
    %v442 = vmul.f32 %v197, %v256
    %v443 = vmul.f32 %v198, %v260
    %v444 = vmul.f32 %v199, %v264
    %v445 = vmul.f32 %v200, %v232
    %v446 = vmul.f32 %v201, %v236
    %v447 = vmul.f32 %v202, %v240
    %v448 = vmul.f32 %v203, %v244
    %v449 = vmul.f32 %v204, %v248
    %v450 = vmul.f32 %v205, %v252
    %v451 = vmul.f32 %v206, %v256
    %v452 = vmul.f32 %v207, %v260
    %v453 = vmul.f32 %v208, %v264
    %v454 = vmul.f32 %v209, %v232
    %v455 = vmul.f32 %v210, %v236
    %v456 = vmul.f32 %v211, %v240
    %v457 = vmul.f32 %v212, %v244
    %v458 = vmul.f32 %v213, %v248
    %v459 = vmul.f32 %v214, %v252
    %v460 = vmul.f32 %v215, %v256
    %v461 = vmul.f32 %v216, %v260
    %v462 = vmul.f32 %v217, %v264
    %v463 = vmul.f32 %v218, %v232
    %v464 = vmul.f32 %v219, %v236
    %v465 = vmul.f32 %v220, %v240
    %v466 = vmul.f32 %v221, %v244
    %v467 = vmul.f32 %v222, %v248
    %v468 = vmul.f32 %v223, %v252
    %v469 = vmul.f32 %v224, %v256
    %v470 = vmul.f32 %v225, %v260
    %v471 = vmul.f32 %v226, %v264
    %v472 = vld [vmem:[%s2] sm:$0xff]
    %v473 = vld [vmem:[%s2 + $0x8] sm:$0xff]
    %v474 = vld [vmem:[%s2 + $0x10] sm:$0xff]
    %v475 = vld [vmem:[%s2 + $0x18] sm:$0xff]
    %v476 = vld [vmem:[%s2 + $0x20] sm:$0xff]
    %v477 = vld [vmem:[%s2 + $0x28] sm:$0xff]
    %v478 = vld [vmem:[%s2 + $0x30] sm:$0xff]
    %v479 = vld [vmem:[%s2 + $0x38] sm:$0xff]
    %v480 = vld [vmem:[%s2 + $0x40] sm:$0xff]
    %v481 = vld [vmem:[%s2 + $0x48] sm:$0xff]
    %v482 = vld [vmem:[%s2 + $0x50] sm:$0xff]
    %v483 = vld [vmem:[%s2 + $0x58] sm:$0xff]
    %v484 = vld [vmem:[%s2 + $0x60] sm:$0xff]
    %v485 = vld [vmem:[%s2 + $0x68] sm:$0xff]
    %v486 = vld [vmem:[%s2 + $0x70] sm:$0xff]
    %v487 = vld [vmem:[%s2 + $0x78] sm:$0xff]
    %v488 = vld [vmem:[%s2 + $0x80] sm:$0xff]
    %v489 = vld [vmem:[%s2 + $0x88] sm:$0xff]
    %v490 = vld [vmem:[%s2 + $0x90] sm:$0xff]
    %v491 = vld [vmem:[%s2 + $0x98] sm:$0xff]
    %v492 = vld [vmem:[%s2 + $0xa0] sm:$0xff]
    %v493 = vld [vmem:[%s2 + $0xa8] sm:$0xff]
    %v494 = vld [vmem:[%s2 + $0xb0] sm:$0xff]
    %v495 = vld [vmem:[%s2 + $0xb8] sm:$0xff]
    %v496 = vld [vmem:[%s2 + $0xc0] sm:$0xff]
    %v497 = vld [vmem:[%s2 + $0xc8] sm:$0xff]
    %v498 = vld [vmem:[%s2 + $0xd0] sm:$0xff]
    %v499 = vld [vmem:[%s2 + $0xd8] sm:$0xff]
    %v500 = vld [vmem:[%s2 + $0xe0] sm:$0xff]
    %v501 = vld [vmem:[%s2 + $0xe8] sm:$0xff]
    %v502 = vld [vmem:[%s2 + $0xf0] sm:$0xff]
    %v503 = vld [vmem:[%s2 + $0xf8] sm:$0xff]
    %v504 = vld [vmem:[%s2 + $0x100] sm:$0xff]
    %v505 = vld [vmem:[%s2 + $0x108] sm:$0xff]
    %v506 = vld [vmem:[%s2 + $0x110] sm:$0xff]
    %v507 = vld [vmem:[%s2 + $0x118] sm:$0xff]
    %v508 = vld [vmem:[%s2 + $0x120] sm:$0xff]
    %v509 = vld [vmem:[%s2 + $0x128] sm:$0xff]
    %v510 = vld [vmem:[%s2 + $0x130] sm:$0xff]
    %v511 = vld [vmem:[%s2 + $0x138] sm:$0xff]
    %v512 = vld [vmem:[%s2 + $0x140] sm:$0xff]
    %v513 = vld [vmem:[%s2 + $0x148] sm:$0xff]
    %v514 = vld [vmem:[%s2 + $0x150] sm:$0xff]
    %v515 = vld [vmem:[%s2 + $0x158] sm:$0xff]
    %v516 = vld [vmem:[%s2 + $0x160] sm:$0xff]
    %v517 = vld [vmem:[%s2 + $0x168] sm:$0xff]
    %v518 = vld [vmem:[%s2 + $0x170] sm:$0xff]
    %v519 = vld [vmem:[%s2 + $0x178] sm:$0xff]
    %v520 = vld [vmem:[%s2 + $0x180] sm:$0xff]
    %v521 = vld [vmem:[%s2 + $0x188] sm:$0xff]
    %v522 = vld [vmem:[%s2 + $0x190] sm:$0xff]
    %v523 = vld [vmem:[%s2 + $0x198] sm:$0xff]
    %v524 = vld [vmem:[%s2 + $0x1a0] sm:$0xff]
    %v525 = vld [vmem:[%s2 + $0x1a8] sm:$0xff]
    %v526 = vld [vmem:[%s2 + $0x1b0] sm:$0xff]
    %v527 = vld [vmem:[%s2 + $0x1b8] sm:$0xff]
    %v528 = vld [vmem:[%s2 + $0x1c0] sm:$0xff]
    %v529 = vld [vmem:[%s2 + $0x1c8] sm:$0xff]
    %v530 = vld [vmem:[%s2 + $0x1d0] sm:$0xff]
    %v531 = vld [vmem:[%s2 + $0x1d8] sm:$0xff]
    %v532 = vld [vmem:[%s2 + $0x1e0] sm:$0xff]
    %v533 = vld [vmem:[%s2 + $0x1e8] sm:$0xff]
    %v534 = vld [vmem:[%s2 + $0x1f0] sm:$0xff]
    %v535 = vld [vmem:[%s2 + $0x1f8] sm:$0xff]
    %v536 = vld [vmem:[%s2 + $0x200] sm:$0xff]
    %v537 = vld [vmem:[%s2 + $0x208] sm:$0xff]
    %v538 = vld [vmem:[%s2 + $0x210] sm:$0xff]
    %v539 = vld [vmem:[%s2 + $0x218] sm:$0xff]
    %v540 = vld [vmem:[%s2 + $0x220] sm:$0xff]
    %v541 = vld [vmem:[%s2 + $0x228] sm:$0xff]
    %v542 = vld [vmem:[%s2 + $0x230] sm:$0xff]
    %v543 = vld [vmem:[%s2 + $0x238] sm:$0xff]
    %v544 = vld [vmem:[%s2 + $0x240] sm:$0xff]
    %v545 = vld [vmem:[%s2 + $0x248] sm:$0xff]
    %v546 = vld [vmem:[%s2 + $0x250] sm:$0xff]
    %v547 = vld [vmem:[%s2 + $0x258] sm:$0xff]
    %v548 = vld [vmem:[%s2 + $0x260] sm:$0xff]
    %v549 = vld [vmem:[%s2 + $0x268] sm:$0xff]
    %v550 = vld [vmem:[%s2 + $0x270] sm:$0xff]
    %v551 = vld [vmem:[%s2 + $0x278] sm:$0xff]
    %v552 = vld [vmem:[%s2 + $0x280] sm:$0xff]
    %v553 = vld [vmem:[%s2 + $0x288] sm:$0xff]
    %v554 = vld [vmem:[%s2 + $0x290] sm:$0xff]
    %v555 = vld [vmem:[%s2 + $0x298] sm:$0xff]
    %v556 = vld [vmem:[%s2 + $0x2a0] sm:$0xff]
    %v557 = vld [vmem:[%s2 + $0x2a8] sm:$0xff]
    %v558 = vld [vmem:[%s2 + $0x2b0] sm:$0xff]
    %v559 = vld [vmem:[%s2 + $0x2b8] sm:$0xff]
    %v560 = vld [vmem:[%s2 + $0x2c0] sm:$0xff]
    %v561 = vld [vmem:[%s2 + $0x2c8] sm:$0xff]
    %v562 = vld [vmem:[%s2 + $0x2d0] sm:$0xff]
    %v563 = vld [vmem:[%s2 + $0x2d8] sm:$0xff]
    %v564 = vld [vmem:[%s2 + $0x2e0] sm:$0xff]
    %v565 = vld [vmem:[%s2 + $0x2e8] sm:$0xff]
    %v566 = vld [vmem:[%s2 + $0x2f0] sm:$0xff]
    %v567 = vld [vmem:[%s2 + $0x2f8] sm:$0xff]
    %v568 = vld [vmem:[%s2 + $0x300] sm:$0xff]
    %v569 = vld [vmem:[%s2 + $0x308] sm:$0xff]
    %v570 = vld [vmem:[%s2 + $0x310] sm:$0xff]
    %v571 = vld [vmem:[%s2 + $0x318] sm:$0xff]
    %v572 = vld [vmem:[%s2 + $0x320] sm:$0xff]
    %v573 = vld [vmem:[%s2 + $0x328] sm:$0xff]
    %v574 = vld [vmem:[%s2 + $0x330] sm:$0xff]
    %v575 = vld [vmem:[%s2 + $0x338] sm:$0xff]
    %v576 = vld [vmem:[%s2 + $0x340] sm:$0xff]
    %v577 = vld [vmem:[%s2 + $0x348] sm:$0xff]
    %v578 = vld [vmem:[%s2 + $0x350] sm:$0xff]
    %v579 = vld [vmem:[%s2 + $0x358] sm:$0xff]
    %v580 = vld [vmem:[%s2 + $0x360] sm:$0xff]
    %v581 = vld [vmem:[%s2 + $0x368] sm:$0xff]
    %v582 = vld [vmem:[%s2 + $0x370] sm:$0xff]
    %v583 = vld [vmem:[%s2 + $0x378] sm:$0xff]
    %v584 = vld [vmem:[%s2 + $0x380] sm:$0xff]
    %v585 = vld [vmem:[%s2 + $0x388] sm:$0xff]
    %v586 = vld [vmem:[%s2 + $0x390] sm:$0xff]
    %v587 = vld [vmem:[%s2 + $0x398] sm:$0xff]
    %v588 = vld [vmem:[%s2 + $0x3a0] sm:$0xff]
    %v589 = vld [vmem:[%s2 + $0x3a8] sm:$0xff]
    %v590 = vld [vmem:[%s2 + $0x3b0] sm:$0xff]
    %v591 = vld [vmem:[%s2 + $0x3b8] sm:$0xff]
    %v592 = vld [vmem:[%s2 + $0x3c0] sm:$0xff]
    %v593 = vld [vmem:[%s2 + $0x3c8] sm:$0xff]
    %v594 = vld [vmem:[%s2 + $0x3d0] sm:$0xff]
    %v595 = vld [vmem:[%s2 + $0x3d8] sm:$0xff]
    %v596 = vld [vmem:[%s2 + $0x3e0] sm:$0xff]
    %v597 = vld [vmem:[%s2 + $0x3e8] sm:$0xff]
    %v598 = vld [vmem:[%s2 + $0x3f0] sm:$0xff]
    %v599 = vld [vmem:[%s2 + $0x3f8] sm:$0xff]
    %v600 = vld [vmem:[%s2 + $0x400] sm:$0xff]
    %v601 = vld [vmem:[%s2 + $0x408] sm:$0xff]
    %v602 = vld [vmem:[%s2 + $0x410] sm:$0xff]
    %v603 = vld [vmem:[%s2 + $0x418] sm:$0xff]
    %v604 = vld [vmem:[%s2 + $0x420] sm:$0xff]
    %v605 = vld [vmem:[%s2 + $0x428] sm:$0xff]
    %v606 = vld [vmem:[%s2 + $0x430] sm:$0xff]
    %v607 = vld [vmem:[%s2 + $0x438] sm:$0xff]
    %v608 = vld [vmem:[%s2 + $0x440] sm:$0xff]
    %v609 = vld [vmem:[%s2 + $0x448] sm:$0xff]
    %v610 = vld [vmem:[%s2 + $0x450] sm:$0xff]
    %v611 = vld [vmem:[%s2 + $0x458] sm:$0xff]
    %v612 = vld [vmem:[%s2 + $0x460] sm:$0xff]
    %v613 = vld [vmem:[%s2 + $0x468] sm:$0xff]
    %v614 = vld [vmem:[%s2 + $0x470] sm:$0xff]
    %v615 = vld [vmem:[%s2 + $0x478] sm:$0xff]
    %v616 = vld [vmem:[%s2 + $0x480] sm:$0xff]
    %v617 = vld [vmem:[%s2 + $0x488] sm:$0xff]
    %v618 = vld [vmem:[%s2 + $0x490] sm:$0xff]
    %v619 = vld [vmem:[%s2 + $0x498] sm:$0xff]
    %v620 = vld [vmem:[%s2 + $0x4a0] sm:$0xff]
    %v621 = vld [vmem:[%s2 + $0x4a8] sm:$0xff]
    %v622 = vld [vmem:[%s2 + $0x4b0] sm:$0xff]
    %v623 = vld [vmem:[%s2 + $0x4b8] sm:$0xff]
    %v624 = vld [vmem:[%s2 + $0x4c0] sm:$0xff]
    %v625 = vld [vmem:[%s2 + $0x4c8] sm:$0xff]
    %v626 = vld [vmem:[%s2 + $0x4d0] sm:$0xff]
    %v627 = vld [vmem:[%s2 + $0x4d8] sm:$0xff]
    %v628 = vld [vmem:[%s2 + $0x4e0] sm:$0xff]
    %v629 = vld [vmem:[%s2 + $0x4e8] sm:$0xff]
    %v630 = vld [vmem:[%s2 + $0x4f0] sm:$0xff]
    %v631 = vld [vmem:[%s2 + $0x4f8] sm:$0xff]
    %v632 = vld [vmem:[%s2 + $0x500] sm:$0xff]
    %v633 = vld [vmem:[%s2 + $0x508] sm:$0xff]
    %v634 = vld [vmem:[%s2 + $0x510] sm:$0xff]
    %v635 = vld [vmem:[%s2 + $0x518] sm:$0xff]
    %v636 = vld [vmem:[%s2 + $0x520] sm:$0xff]
    %v637 = vld [vmem:[%s2 + $0x528] sm:$0xff]
    %v638 = vld [vmem:[%s2 + $0x530] sm:$0xff]
    %v639 = vld [vmem:[%s2 + $0x538] sm:$0xff]
    %v640 = vld [vmem:[%s2 + $0x540] sm:$0xff]
    %v641 = vld [vmem:[%s2 + $0x548] sm:$0xff]
    %v642 = vld [vmem:[%s2 + $0x550] sm:$0xff]
    %v643 = vld [vmem:[%s2 + $0x558] sm:$0xff]
    %v644 = vld [vmem:[%s2 + $0x560] sm:$0xff]
    %v645 = vld [vmem:[%s2 + $0x568] sm:$0xff]
    %v646 = vld [vmem:[%s2 + $0x570] sm:$0xff]
    %v647 = vld [vmem:[%s2 + $0x578] sm:$0xff]
    %v648 = vld [vmem:[%s2 + $0x580] sm:$0xff]
    %v649 = vld [vmem:[%s2 + $0x588] sm:$0xff]
    %v650 = vld [vmem:[%s2 + $0x590] sm:$0xff]
    %v651 = vld [vmem:[%s2 + $0x598] sm:$0xff]
    %v652 = vld [vmem:[%s2 + $0x5a0] sm:$0xff]
    %v653 = vld [vmem:[%s2 + $0x5a8] sm:$0xff]
    %v654 = vld [vmem:[%s2 + $0x5b0] sm:$0xff]
    %v655 = vld [vmem:[%s2 + $0x5b8] sm:$0xff]
    %v656 = vld [vmem:[%s2 + $0x5c0] sm:$0xff]
    %v657 = vld [vmem:[%s2 + $0x5c8] sm:$0xff]
    %v658 = vld [vmem:[%s2 + $0x5d0] sm:$0xff]
    %v659 = vld [vmem:[%s2 + $0x5d8] sm:$0xff]
    %v660 = vld [vmem:[%s2 + $0x5e0] sm:$0xff]
    %v661 = vld [vmem:[%s2 + $0x5e8] sm:$0xff]
    %v662 = vld [vmem:[%s2 + $0x5f0] sm:$0xff]
    %v663 = vld [vmem:[%s2 + $0x5f8] sm:$0xff]
    %v664 = vld [vmem:[%s2 + $0x600] sm:$0xff]
    %v665 = vld [vmem:[%s2 + $0x608] sm:$0xff]
    %v666 = vld [vmem:[%s2 + $0x610] sm:$0xff]
    %v667 = vld [vmem:[%s2 + $0x618] sm:$0xff]
    %v668 = vld [vmem:[%s2 + $0x620] sm:$0xff]
    %v669 = vld [vmem:[%s2 + $0x628] sm:$0xff]
    %v670 = vld [vmem:[%s2 + $0x630] sm:$0xff]
    %v671 = vld [vmem:[%s2 + $0x638] sm:$0xff]
    %v672 = vld [vmem:[%s2 + $0x640] sm:$0xff]
    %v673 = vld [vmem:[%s2 + $0x648] sm:$0xff]
    %v674 = vld [vmem:[%s2 + $0x650] sm:$0xff]
    %v675 = vld [vmem:[%s2 + $0x658] sm:$0xff]
    %v676 = vld [vmem:[%s2 + $0x660] sm:$0xff]
    %v677 = vld [vmem:[%s2 + $0x668] sm:$0xff]
    %v678 = vld [vmem:[%s2 + $0x670] sm:$0xff]
    %v679 = vld [vmem:[%s2 + $0x678] sm:$0xff]
    %v680 = vld [vmem:[%s2 + $0x680] sm:$0xff]
    %v681 = vld [vmem:[%s2 + $0x688] sm:$0xff]
    %v682 = vld [vmem:[%s2 + $0x690] sm:$0xff]
    %v683 = vld [vmem:[%s2 + $0x698] sm:$0xff]
    %v684 = vld [vmem:[%s2 + $0x6a0] sm:$0xff]
    %v685 = vld [vmem:[%s2 + $0x6a8] sm:$0xff]
    %v686 = vld [vmem:[%s2 + $0x6b0] sm:$0xff]
    %v687 = vld [vmem:[%s2 + $0x6b8] sm:$0xff]
    %v688 = vld [vmem:[%s2 + $0x6c0] sm:$0xff]
    %v689 = vld [vmem:[%s2 + $0x6c8] sm:$0xff]
    %v690 = vld [vmem:[%s2 + $0x6d0] sm:$0xff]
    %v691 = vld [vmem:[%s2 + $0x6d8] sm:$0xff]
    %v692 = vld [vmem:[%s2 + $0x6e0] sm:$0xff]
    %v693 = vld [vmem:[%s2 + $0x6e8] sm:$0xff]
    %v694 = vld [vmem:[%s2 + $0x6f0] sm:$0xff]
    %v695 = vld [vmem:[%s2 + $0x6f8] sm:$0xff]
    %v696 = vld [vmem:[%s2 + $0x700] sm:$0xff]
    %v697 = vld [vmem:[%s2 + $0x708] sm:$0xff]
    %v698 = vld [vmem:[%s2 + $0x710] sm:$0xff]
    %v699 = vld [vmem:[%s2 + $0x718] sm:$0xff]
    %v700 = vld [vmem:[%s2 + $0x720] sm:$0xff]
    %v701 = vld [vmem:[%s2 + $0x728] sm:$0xff]
    %v702 = vld [vmem:[%s2 + $0x730] sm:$0xff]
    %v703 = vld [vmem:[%s2 + $0x738] sm:$0xff]
    %v704 = vld [vmem:[%s2 + $0x740] sm:$0xff]
    %v705 = vld [vmem:[%s2 + $0x748] sm:$0xff]
    %v706 = vld [vmem:[%s2 + $0x750] sm:$0xff]
    %v707 = vld [vmem:[%s2 + $0x758] sm:$0xff]
    %v708 = vld [vmem:[%s2 + $0x760] sm:$0xff]
    %v709 = vld [vmem:[%s2 + $0x768] sm:$0xff]
    %v710 = vld [vmem:[%s2 + $0x770] sm:$0xff]
    %v711 = vld [vmem:[%s2 + $0x778] sm:$0xff]
    %v712 = vld [vmem:[%s2 + $0x780] sm:$0xff]
    %v713 = vld [vmem:[%s2 + $0x788] sm:$0xff]
    %v714 = vld [vmem:[%s2 + $0x790] sm:$0xff]
    %v715 = vld [vmem:[%s2 + $0x798] sm:$0xff]
    %v716 = vld [vmem:[%s2 + $0x7a0] sm:$0xff]
    %v717 = vld [vmem:[%s2 + $0x7a8] sm:$0xff]
    %v718 = vld [vmem:[%s2 + $0x7b0] sm:$0xff]
    %v719 = vld [vmem:[%s2 + $0x7b8] sm:$0xff]
    %v720 = vld [vmem:[%s2 + $0x7c0] sm:$0xff]
    %v721 = vld [vmem:[%s2 + $0x7c8] sm:$0xff]
    %v722 = vld [vmem:[%s2 + $0x7d0] sm:$0xff]
    %v723 = vld [vmem:[%s2 + $0x7d8] sm:$0xff]
    %v724 = vld [vmem:[%s2 + $0x7e0] sm:$0xff]
    %v725 = vld [vmem:[%s2 + $0x7e8] sm:$0xff]
    %v726 = vld [vmem:[%s2 + $0x7f0] sm:$0xff]
    %v727 = vld [vmem:[%s2 + $0x7f8] sm:$0xff]
    %v728 = vld [vmem:[%s2 + $0x800] sm:$0xff]
    %v729 = vld [vmem:[%s2 + $0x808] sm:$0xff]
    %v730 = vld [vmem:[%s2 + $0x810] sm:$0xff]
    %v731 = vld [vmem:[%s2 + $0x818] sm:$0xff]
    %v732 = vld [vmem:[%s2 + $0x820] sm:$0xff]
    %v733 = vld [vmem:[%s2 + $0x828] sm:$0xff]
    %v734 = vld [vmem:[%s2 + $0x830] sm:$0xff]
    %v735 = vld [vmem:[%s2 + $0x838] sm:$0xff]
    %vm736 = vcmask 261120
    %v738 = vsel %vm736, %v282, 0
    %v741 = vsel %vm736, %v291, 0
    %v744 = vsel %vm736, %v300, 0
    %v747 = vsel %vm736, %v309, 0
    %v750 = vsel %vm736, %v318, 0
    %v753 = vsel %vm736, %v327, 0
    %v756 = vsel %vm736, %v336, 0
    %v759 = vsel %vm736, %v345, 0
    %v762 = vsel %vm736, %v354, 0
    %v765 = vsel %vm736, %v363, 0
    %v768 = vsel %vm736, %v372, 0
    %v771 = vsel %vm736, %v381, 0
    %v774 = vsel %vm736, %v390, 0
    %v777 = vsel %vm736, %v399, 0
    %v780 = vsel %vm736, %v408, 0
    %v783 = vsel %vm736, %v417, 0
    %v786 = vsel %vm736, %v426, 0
    %v789 = vsel %vm736, %v435, 0
    %v792 = vsel %vm736, %v444, 0
    %v795 = vsel %vm736, %v453, 0
    %v798 = vsel %vm736, %v462, 0
    %v801 = vsel %vm736, %v471, 0
    %803 = vmatprep.subr.mxu0 %v503
    %804 = vmatpush1.msra.mxu0 %v502
    %805 = vmatprep.subr.mxu0 %v501
    %806 = vmatpush1.msra.mxu0 %v500
    %807 = vmatprep.subr.mxu0 %v499
    %808 = vmatpush1.msra.mxu0 %v498
    %809 = vmatprep.subr.mxu0 %v497
    %810 = vmatpush1.msra.mxu0 %v496
    %811 = vmatprep.subr.mxu0 %v495
    %812 = vmatpush1.msra.mxu0 %v494
    %813 = vmatprep.subr.mxu0 %v493
    %814 = vmatpush1.msra.mxu0 %v492
    %815 = vmatprep.subr.mxu0 %v491
    %816 = vmatpush1.msra.mxu0 %v490
    %817 = vmatprep.subr.mxu0 %v489
    %818 = vmatpush1.msra.mxu0 %v488
    %819 = vmatprep.subr.mxu0 %v487
    %820 = vmatpush1.msra.mxu0 %v486
    %821 = vmatprep.subr.mxu0 %v485
    %822 = vmatpush1.msra.mxu0 %v484
    %823 = vmatprep.subr.mxu0 %v483
    %824 = vmatpush1.msra.mxu0 %v482
    %825 = vmatprep.subr.mxu0 %v481
    %826 = vmatpush1.msra.mxu0 %v480
    %827 = vmatprep.subr.mxu0 %v479
    %828 = vmatpush1.msra.mxu0 %v478
    %829 = vmatprep.subr.mxu0 %v477
    %830 = vmatpush1.msra.mxu0 %v476
    %831 = vmatprep.subr.mxu0 %v475
    %832 = vmatpush1.msra.mxu0 %v474
    %833 = vmatprep.subr.mxu0 %v473
    %834 = vmatpush1.msra.mxu0 %v472
    %835 = vmatprep.subr.mxu0 %v535
    %836 = vmatpush2.msra.mxu0 %v534
    %837 = vmatprep.subr.mxu0 %v533
    %838 = vmatpush2.msra.mxu0 %v532
    %839 = vmatprep.subr.mxu0 %v531
    %840 = vmatpush2.msra.mxu0 %v530
    %841 = vmatprep.subr.mxu0 %v529
    %842 = vmatpush2.msra.mxu0 %v528
    %843 = vmatprep.subr.mxu0 %v527
    %844 = vmatpush2.msra.mxu0 %v526
    %845 = vmatprep.subr.mxu0 %v525
    %846 = vmatpush2.msra.mxu0 %v524
    %847 = vmatprep.subr.mxu0 %v523
    %848 = vmatpush2.msra.mxu0 %v522
    %849 = vmatprep.subr.mxu0 %v521
    %850 = vmatpush2.msra.mxu0 %v520
    %851 = vmatprep.subr.mxu0 %v519
    %852 = vmatpush2.msra.mxu0 %v518
    %853 = vmatprep.subr.mxu0 %v517
    %854 = vmatpush2.msra.mxu0 %v516
    %855 = vmatprep.subr.mxu0 %v515
    %856 = vmatpush2.msra.mxu0 %v514
    %857 = vmatprep.subr.mxu0 %v513
    %858 = vmatpush2.msra.mxu0 %v512
    %859 = vmatprep.subr.mxu0 %v511
    %860 = vmatpush2.msra.mxu0 %v510
    %861 = vmatprep.subr.mxu0 %v509
    %862 = vmatpush2.msra.mxu0 %v508
    %863 = vmatprep.subr.mxu0 %v507
    %864 = vmatpush2.msra.mxu0 %v506
    %865 = vmatprep.subr.mxu0 %v505
    %866 = vmatpush2.msra.mxu0 %v504
    %867 = vmatprep.mubr.f32.mxu0 %v275
    %868 = vmatmul.mubr.f32.gmra.mxu0 %v274
    %v869 = vpop.f32.mrf.mxu0
    %v870 = vadd.f32 0.0, %v869
    %v871 = vpop.f32.mrf.mxu0
    %v872 = vadd.f32 0.0, %v871
    %873 = vmatprep.mubr.f32.mxu0 %v284
    %874 = vmatmul.mubr.f32.gmra.mxu0 %v283
    %v875 = vpop.f32.mrf.mxu0
    %v876 = vadd.f32 0.0, %v875
    %v877 = vpop.f32.mrf.mxu0
    %v878 = vadd.f32 0.0, %v877
    %879 = vmatprep.mubr.f32.mxu0 %v293
    %880 = vmatmul.mubr.f32.gmra.mxu0 %v292
    %v881 = vpop.f32.mrf.mxu0
    %v882 = vadd.f32 0.0, %v881
    %v883 = vpop.f32.mrf.mxu0
    %v884 = vadd.f32 0.0, %v883
    %885 = vmatprep.mubr.f32.mxu0 %v302
    %886 = vmatmul.mubr.f32.gmra.mxu0 %v301
    %v887 = vpop.f32.mrf.mxu0
    %v888 = vadd.f32 0.0, %v887
    %v889 = vpop.f32.mrf.mxu0
    %v890 = vadd.f32 0.0, %v889
    %891 = vmatprep.mubr.f32.mxu0 %v311
    %892 = vmatmul.mubr.f32.gmra.mxu0 %v310
    %v893 = vpop.f32.mrf.mxu0
    %v894 = vadd.f32 0.0, %v893
    %v895 = vpop.f32.mrf.mxu0
    %v896 = vadd.f32 0.0, %v895
    %897 = vmatprep.mubr.f32.mxu0 %v320
    %898 = vmatmul.mubr.f32.gmra.mxu0 %v319
    %v899 = vpop.f32.mrf.mxu0
    %v900 = vadd.f32 0.0, %v899
    %v901 = vpop.f32.mrf.mxu0
    %v902 = vadd.f32 0.0, %v901
    %903 = vmatprep.mubr.f32.mxu0 %v329
    %904 = vmatmul.mubr.f32.gmra.mxu0 %v328
    %v905 = vpop.f32.mrf.mxu0
    %v906 = vadd.f32 0.0, %v905
    %v907 = vpop.f32.mrf.mxu0
    %v908 = vadd.f32 0.0, %v907
    %909 = vmatprep.mubr.f32.mxu0 %v338
    %910 = vmatmul.mubr.f32.gmra.mxu0 %v337
    %v911 = vpop.f32.mrf.mxu0
    %v912 = vadd.f32 0.0, %v911
    %v913 = vpop.f32.mrf.mxu0
    %v914 = vadd.f32 0.0, %v913
    %915 = vmatprep.mubr.f32.mxu0 %v347
    %916 = vmatmul.mubr.f32.gmra.mxu0 %v346
    %v917 = vpop.f32.mrf.mxu0
    %v918 = vadd.f32 0.0, %v917
    %v919 = vpop.f32.mrf.mxu0
    %v920 = vadd.f32 0.0, %v919
    %921 = vmatprep.mubr.f32.mxu0 %v356
    %922 = vmatmul.mubr.f32.gmra.mxu0 %v355
    %v923 = vpop.f32.mrf.mxu0
    %v924 = vadd.f32 0.0, %v923
    %v925 = vpop.f32.mrf.mxu0
    %v926 = vadd.f32 0.0, %v925
    %927 = vmatprep.mubr.f32.mxu0 %v365
    %928 = vmatmul.mubr.f32.gmra.mxu0 %v364
    %v929 = vpop.f32.mrf.mxu0
    %v930 = vadd.f32 0.0, %v929
    %v931 = vpop.f32.mrf.mxu0
    %v932 = vadd.f32 0.0, %v931
    %933 = vmatprep.mubr.f32.mxu0 %v374
    %934 = vmatmul.mubr.f32.gmra.mxu0 %v373
    %v935 = vpop.f32.mrf.mxu0
    %v936 = vadd.f32 0.0, %v935
    %v937 = vpop.f32.mrf.mxu0
    %v938 = vadd.f32 0.0, %v937
    %939 = vmatprep.mubr.f32.mxu0 %v383
    %940 = vmatmul.mubr.f32.gmra.mxu0 %v382
    %v941 = vpop.f32.mrf.mxu0
    %v942 = vadd.f32 0.0, %v941
    %v943 = vpop.f32.mrf.mxu0
    %v944 = vadd.f32 0.0, %v943
    %945 = vmatprep.mubr.f32.mxu0 %v392
    %946 = vmatmul.mubr.f32.gmra.mxu0 %v391
    %v947 = vpop.f32.mrf.mxu0
    %v948 = vadd.f32 0.0, %v947
    %v949 = vpop.f32.mrf.mxu0
    %v950 = vadd.f32 0.0, %v949
    %951 = vmatprep.mubr.f32.mxu0 %v401
    %952 = vmatmul.mubr.f32.gmra.mxu0 %v400
    %v953 = vpop.f32.mrf.mxu0
    %v954 = vadd.f32 0.0, %v953
    %v955 = vpop.f32.mrf.mxu0
    %v956 = vadd.f32 0.0, %v955
    %957 = vmatprep.mubr.f32.mxu0 %v410
    %958 = vmatmul.mubr.f32.gmra.mxu0 %v409
    %v959 = vpop.f32.mrf.mxu0
    %v960 = vadd.f32 0.0, %v959
    %v961 = vpop.f32.mrf.mxu0
    %v962 = vadd.f32 0.0, %v961
    %963 = vmatprep.mubr.f32.mxu0 %v419
    %964 = vmatmul.mubr.f32.gmra.mxu0 %v418
    %v965 = vpop.f32.mrf.mxu0
    %v966 = vadd.f32 0.0, %v965
    %v967 = vpop.f32.mrf.mxu0
    %v968 = vadd.f32 0.0, %v967
    %969 = vmatprep.mubr.f32.mxu0 %v428
    %970 = vmatmul.mubr.f32.gmra.mxu0 %v427
    %v971 = vpop.f32.mrf.mxu0
    %v972 = vadd.f32 0.0, %v971
    %v973 = vpop.f32.mrf.mxu0
    %v974 = vadd.f32 0.0, %v973
    %975 = vmatprep.mubr.f32.mxu0 %v437
    %976 = vmatmul.mubr.f32.gmra.mxu0 %v436
    %v977 = vpop.f32.mrf.mxu0
    %v978 = vadd.f32 0.0, %v977
    %v979 = vpop.f32.mrf.mxu0
    %v980 = vadd.f32 0.0, %v979
    %981 = vmatprep.mubr.f32.mxu0 %v446
    %982 = vmatmul.mubr.f32.gmra.mxu0 %v445
    %v983 = vpop.f32.mrf.mxu0
    %v984 = vadd.f32 0.0, %v983
    %v985 = vpop.f32.mrf.mxu0
    %v986 = vadd.f32 0.0, %v985
    %987 = vmatprep.mubr.f32.mxu0 %v455
    %988 = vmatmul.mubr.f32.gmra.mxu0 %v454
    %v989 = vpop.f32.mrf.mxu0
    %v990 = vadd.f32 0.0, %v989
    %v991 = vpop.f32.mrf.mxu0
    %v992 = vadd.f32 0.0, %v991
    %993 = vmatprep.mubr.f32.mxu0 %v464
    %994 = vmatmul.mubr.f32.gmra.mxu0 %v463
    %v995 = vpop.f32.mrf.mxu0
    %v996 = vadd.f32 0.0, %v995
    %v997 = vpop.f32.mrf.mxu0
    %v998 = vadd.f32 0.0, %v997
    %999 = vdwg.mxu0
    %1000 = vmatprep.subr.mxu0 %v567
    %1001 = vmatpush1.msra.mxu0 %v566
    %1002 = vmatprep.subr.mxu0 %v565
    %1003 = vmatpush1.msra.mxu0 %v564
    %1004 = vmatprep.subr.mxu0 %v563
    %1005 = vmatpush1.msra.mxu0 %v562
    %1006 = vmatprep.subr.mxu0 %v561
    %1007 = vmatpush1.msra.mxu0 %v560
    %1008 = vmatprep.subr.mxu0 %v559
    %1009 = vmatpush1.msra.mxu0 %v558
    %1010 = vmatprep.subr.mxu0 %v557
    %1011 = vmatpush1.msra.mxu0 %v556
    %1012 = vmatprep.subr.mxu0 %v555
    %1013 = vmatpush1.msra.mxu0 %v554
    %1014 = vmatprep.subr.mxu0 %v553
    %1015 = vmatpush1.msra.mxu0 %v552
    %1016 = vmatprep.subr.mxu0 %v551
    %1017 = vmatpush1.msra.mxu0 %v550
    %1018 = vmatprep.subr.mxu0 %v549
    %1019 = vmatpush1.msra.mxu0 %v548
    %1020 = vmatprep.subr.mxu0 %v547
    %1021 = vmatpush1.msra.mxu0 %v546
    %1022 = vmatprep.subr.mxu0 %v545
    %1023 = vmatpush1.msra.mxu0 %v544
    %1024 = vmatprep.subr.mxu0 %v543
    %1025 = vmatpush1.msra.mxu0 %v542
    %1026 = vmatprep.subr.mxu0 %v541
    %1027 = vmatpush1.msra.mxu0 %v540
    %1028 = vmatprep.subr.mxu0 %v539
    %1029 = vmatpush1.msra.mxu0 %v538
    %1030 = vmatprep.subr.mxu0 %v537
    %1031 = vmatpush1.msra.mxu0 %v536
    %1032 = vmatprep.subr.mxu0 %v599
    %1033 = vmatpush2.msra.mxu0 %v598
    %1034 = vmatprep.subr.mxu0 %v597
    %1035 = vmatpush2.msra.mxu0 %v596
    %1036 = vmatprep.subr.mxu0 %v595
    %1037 = vmatpush2.msra.mxu0 %v594
    %1038 = vmatprep.subr.mxu0 %v593
    %1039 = vmatpush2.msra.mxu0 %v592
    %1040 = vmatprep.subr.mxu0 %v591
    %1041 = vmatpush2.msra.mxu0 %v590
    %1042 = vmatprep.subr.mxu0 %v589
    %1043 = vmatpush2.msra.mxu0 %v588
    %1044 = vmatprep.subr.mxu0 %v587
    %1045 = vmatpush2.msra.mxu0 %v586
    %1046 = vmatprep.subr.mxu0 %v585
    %1047 = vmatpush2.msra.mxu0 %v584
    %1048 = vmatprep.subr.mxu0 %v583
    %1049 = vmatpush2.msra.mxu0 %v582
    %1050 = vmatprep.subr.mxu0 %v581
    %1051 = vmatpush2.msra.mxu0 %v580
    %1052 = vmatprep.subr.mxu0 %v579
    %1053 = vmatpush2.msra.mxu0 %v578
    %1054 = vmatprep.subr.mxu0 %v577
    %1055 = vmatpush2.msra.mxu0 %v576
    %1056 = vmatprep.subr.mxu0 %v575
    %1057 = vmatpush2.msra.mxu0 %v574
    %1058 = vmatprep.subr.mxu0 %v573
    %1059 = vmatpush2.msra.mxu0 %v572
    %1060 = vmatprep.subr.mxu0 %v571
    %1061 = vmatpush2.msra.mxu0 %v570
    %1062 = vmatprep.subr.mxu0 %v569
    %1063 = vmatpush2.msra.mxu0 %v568
    %1064 = vmatprep.mubr.f32.mxu0 %v277
    %1065 = vmatmul.mubr.f32.gmra.mxu0 %v276
    %v1066 = vpop.f32.mrf.mxu0
    %v1067 = vadd.f32 %v870, %v1066
    %v1068 = vpop.f32.mrf.mxu0
    %v1069 = vadd.f32 %v872, %v1068
    %1070 = vmatprep.mubr.f32.mxu0 %v286
    %1071 = vmatmul.mubr.f32.gmra.mxu0 %v285
    %v1072 = vpop.f32.mrf.mxu0
    %v1073 = vadd.f32 %v876, %v1072
    %v1074 = vpop.f32.mrf.mxu0
    %v1075 = vadd.f32 %v878, %v1074
    %1076 = vmatprep.mubr.f32.mxu0 %v295
    %1077 = vmatmul.mubr.f32.gmra.mxu0 %v294
    %v1078 = vpop.f32.mrf.mxu0
    %v1079 = vadd.f32 %v882, %v1078
    %v1080 = vpop.f32.mrf.mxu0
    %v1081 = vadd.f32 %v884, %v1080
    %1082 = vmatprep.mubr.f32.mxu0 %v304
    %1083 = vmatmul.mubr.f32.gmra.mxu0 %v303
    %v1084 = vpop.f32.mrf.mxu0
    %v1085 = vadd.f32 %v888, %v1084
    %v1086 = vpop.f32.mrf.mxu0
    %v1087 = vadd.f32 %v890, %v1086
    %1088 = vmatprep.mubr.f32.mxu0 %v313
    %1089 = vmatmul.mubr.f32.gmra.mxu0 %v312
    %v1090 = vpop.f32.mrf.mxu0
    %v1091 = vadd.f32 %v894, %v1090
    %v1092 = vpop.f32.mrf.mxu0
    %v1093 = vadd.f32 %v896, %v1092
    %1094 = vmatprep.mubr.f32.mxu0 %v322
    %1095 = vmatmul.mubr.f32.gmra.mxu0 %v321
    %v1096 = vpop.f32.mrf.mxu0
    %v1097 = vadd.f32 %v900, %v1096
    %v1098 = vpop.f32.mrf.mxu0
    %v1099 = vadd.f32 %v902, %v1098
    %1100 = vmatprep.mubr.f32.mxu0 %v331
    %1101 = vmatmul.mubr.f32.gmra.mxu0 %v330
    %v1102 = vpop.f32.mrf.mxu0
    %v1103 = vadd.f32 %v906, %v1102
    %v1104 = vpop.f32.mrf.mxu0
    %v1105 = vadd.f32 %v908, %v1104
    %1106 = vmatprep.mubr.f32.mxu0 %v340
    %1107 = vmatmul.mubr.f32.gmra.mxu0 %v339
    %v1108 = vpop.f32.mrf.mxu0
    %v1109 = vadd.f32 %v912, %v1108
    %v1110 = vpop.f32.mrf.mxu0
    %v1111 = vadd.f32 %v914, %v1110
    %1112 = vmatprep.mubr.f32.mxu0 %v349
    %1113 = vmatmul.mubr.f32.gmra.mxu0 %v348
    %v1114 = vpop.f32.mrf.mxu0
    %v1115 = vadd.f32 %v918, %v1114
    %v1116 = vpop.f32.mrf.mxu0
    %v1117 = vadd.f32 %v920, %v1116
    %1118 = vmatprep.mubr.f32.mxu0 %v358
    %1119 = vmatmul.mubr.f32.gmra.mxu0 %v357
    %v1120 = vpop.f32.mrf.mxu0
    %v1121 = vadd.f32 %v924, %v1120
    %v1122 = vpop.f32.mrf.mxu0
    %v1123 = vadd.f32 %v926, %v1122
    %1124 = vmatprep.mubr.f32.mxu0 %v367
    %1125 = vmatmul.mubr.f32.gmra.mxu0 %v366
    %v1126 = vpop.f32.mrf.mxu0
    %v1127 = vadd.f32 %v930, %v1126
    %v1128 = vpop.f32.mrf.mxu0
    %v1129 = vadd.f32 %v932, %v1128
    %1130 = vmatprep.mubr.f32.mxu0 %v376
    %1131 = vmatmul.mubr.f32.gmra.mxu0 %v375
    %v1132 = vpop.f32.mrf.mxu0
    %v1133 = vadd.f32 %v936, %v1132
    %v1134 = vpop.f32.mrf.mxu0
    %v1135 = vadd.f32 %v938, %v1134
    %1136 = vmatprep.mubr.f32.mxu0 %v385
    %1137 = vmatmul.mubr.f32.gmra.mxu0 %v384
    %v1138 = vpop.f32.mrf.mxu0
    %v1139 = vadd.f32 %v942, %v1138
    %v1140 = vpop.f32.mrf.mxu0
    %v1141 = vadd.f32 %v944, %v1140
    %1142 = vmatprep.mubr.f32.mxu0 %v394
    %1143 = vmatmul.mubr.f32.gmra.mxu0 %v393
    %v1144 = vpop.f32.mrf.mxu0
    %v1145 = vadd.f32 %v948, %v1144
    %v1146 = vpop.f32.mrf.mxu0
    %v1147 = vadd.f32 %v950, %v1146
    %1148 = vmatprep.mubr.f32.mxu0 %v403
    %1149 = vmatmul.mubr.f32.gmra.mxu0 %v402
    %v1150 = vpop.f32.mrf.mxu0
    %v1151 = vadd.f32 %v954, %v1150
    %v1152 = vpop.f32.mrf.mxu0
    %v1153 = vadd.f32 %v956, %v1152
    %1154 = vmatprep.mubr.f32.mxu0 %v412
    %1155 = vmatmul.mubr.f32.gmra.mxu0 %v411
    %v1156 = vpop.f32.mrf.mxu0
    %v1157 = vadd.f32 %v960, %v1156
    %v1158 = vpop.f32.mrf.mxu0
    %v1159 = vadd.f32 %v962, %v1158
    %1160 = vmatprep.mubr.f32.mxu0 %v421
    %1161 = vmatmul.mubr.f32.gmra.mxu0 %v420
    %v1162 = vpop.f32.mrf.mxu0
    %v1163 = vadd.f32 %v966, %v1162
    %v1164 = vpop.f32.mrf.mxu0
    %v1165 = vadd.f32 %v968, %v1164
    %1166 = vmatprep.mubr.f32.mxu0 %v430
    %1167 = vmatmul.mubr.f32.gmra.mxu0 %v429
    %v1168 = vpop.f32.mrf.mxu0
    %v1169 = vadd.f32 %v972, %v1168
    %v1170 = vpop.f32.mrf.mxu0
    %v1171 = vadd.f32 %v974, %v1170
    %1172 = vmatprep.mubr.f32.mxu0 %v439
    %1173 = vmatmul.mubr.f32.gmra.mxu0 %v438
    %v1174 = vpop.f32.mrf.mxu0
    %v1175 = vadd.f32 %v978, %v1174
    %v1176 = vpop.f32.mrf.mxu0
    %v1177 = vadd.f32 %v980, %v1176
    %1178 = vmatprep.mubr.f32.mxu0 %v448
    %1179 = vmatmul.mubr.f32.gmra.mxu0 %v447
    %v1180 = vpop.f32.mrf.mxu0
    %v1181 = vadd.f32 %v984, %v1180
    %v1182 = vpop.f32.mrf.mxu0
    %v1183 = vadd.f32 %v986, %v1182
    %1184 = vmatprep.mubr.f32.mxu0 %v457
    %1185 = vmatmul.mubr.f32.gmra.mxu0 %v456
    %v1186 = vpop.f32.mrf.mxu0
    %v1187 = vadd.f32 %v990, %v1186
    %v1188 = vpop.f32.mrf.mxu0
    %v1189 = vadd.f32 %v992, %v1188
    %1190 = vmatprep.mubr.f32.mxu0 %v466
    %1191 = vmatmul.mubr.f32.gmra.mxu0 %v465
    %v1192 = vpop.f32.mrf.mxu0
    %v1193 = vadd.f32 %v996, %v1192
    %v1194 = vpop.f32.mrf.mxu0
    %v1195 = vadd.f32 %v998, %v1194
    %1196 = vdwg.mxu0
    %1197 = vmatprep.subr.mxu0 %v631
    %1198 = vmatpush1.msra.mxu0 %v630
    %1199 = vmatprep.subr.mxu0 %v629
    %1200 = vmatpush1.msra.mxu0 %v628
    %1201 = vmatprep.subr.mxu0 %v627
    %1202 = vmatpush1.msra.mxu0 %v626
    %1203 = vmatprep.subr.mxu0 %v625
    %1204 = vmatpush1.msra.mxu0 %v624
    %1205 = vmatprep.subr.mxu0 %v623
    %1206 = vmatpush1.msra.mxu0 %v622
    %1207 = vmatprep.subr.mxu0 %v621
    %1208 = vmatpush1.msra.mxu0 %v620
    %1209 = vmatprep.subr.mxu0 %v619
    %1210 = vmatpush1.msra.mxu0 %v618
    %1211 = vmatprep.subr.mxu0 %v617
    %1212 = vmatpush1.msra.mxu0 %v616
    %1213 = vmatprep.subr.mxu0 %v615
    %1214 = vmatpush1.msra.mxu0 %v614
    %1215 = vmatprep.subr.mxu0 %v613
    %1216 = vmatpush1.msra.mxu0 %v612
    %1217 = vmatprep.subr.mxu0 %v611
    %1218 = vmatpush1.msra.mxu0 %v610
    %1219 = vmatprep.subr.mxu0 %v609
    %1220 = vmatpush1.msra.mxu0 %v608
    %1221 = vmatprep.subr.mxu0 %v607
    %1222 = vmatpush1.msra.mxu0 %v606
    %1223 = vmatprep.subr.mxu0 %v605
    %1224 = vmatpush1.msra.mxu0 %v604
    %1225 = vmatprep.subr.mxu0 %v603
    %1226 = vmatpush1.msra.mxu0 %v602
    %1227 = vmatprep.subr.mxu0 %v601
    %1228 = vmatpush1.msra.mxu0 %v600
    %1229 = vmatprep.subr.mxu0 %v663
    %1230 = vmatpush2.msra.mxu0 %v662
    %1231 = vmatprep.subr.mxu0 %v661
    %1232 = vmatpush2.msra.mxu0 %v660
    %1233 = vmatprep.subr.mxu0 %v659
    %1234 = vmatpush2.msra.mxu0 %v658
    %1235 = vmatprep.subr.mxu0 %v657
    %1236 = vmatpush2.msra.mxu0 %v656
    %1237 = vmatprep.subr.mxu0 %v655
    %1238 = vmatpush2.msra.mxu0 %v654
    %1239 = vmatprep.subr.mxu0 %v653
    %1240 = vmatpush2.msra.mxu0 %v652
    %1241 = vmatprep.subr.mxu0 %v651
    %1242 = vmatpush2.msra.mxu0 %v650
    %1243 = vmatprep.subr.mxu0 %v649
    %1244 = vmatpush2.msra.mxu0 %v648
    %1245 = vmatprep.subr.mxu0 %v647
    %1246 = vmatpush2.msra.mxu0 %v646
    %1247 = vmatprep.subr.mxu0 %v645
    %1248 = vmatpush2.msra.mxu0 %v644
    %1249 = vmatprep.subr.mxu0 %v643
    %1250 = vmatpush2.msra.mxu0 %v642
    %1251 = vmatprep.subr.mxu0 %v641
    %1252 = vmatpush2.msra.mxu0 %v640
    %1253 = vmatprep.subr.mxu0 %v639
    %1254 = vmatpush2.msra.mxu0 %v638
    %1255 = vmatprep.subr.mxu0 %v637
    %1256 = vmatpush2.msra.mxu0 %v636
    %1257 = vmatprep.subr.mxu0 %v635
    %1258 = vmatpush2.msra.mxu0 %v634
    %1259 = vmatprep.subr.mxu0 %v633
    %1260 = vmatpush2.msra.mxu0 %v632
    %1261 = vmatprep.mubr.f32.mxu0 %v279
    %1262 = vmatmul.mubr.f32.gmra.mxu0 %v278
    %v1263 = vpop.f32.mrf.mxu0
    %v1264 = vadd.f32 %v1067, %v1263
    %v1265 = vpop.f32.mrf.mxu0
    %v1266 = vadd.f32 %v1069, %v1265
    %1267 = vmatprep.mubr.f32.mxu0 %v288
    %1268 = vmatmul.mubr.f32.gmra.mxu0 %v287
    %v1269 = vpop.f32.mrf.mxu0
    %v1270 = vadd.f32 %v1073, %v1269
    %v1271 = vpop.f32.mrf.mxu0
    %v1272 = vadd.f32 %v1075, %v1271
    %1273 = vmatprep.mubr.f32.mxu0 %v297
    %1274 = vmatmul.mubr.f32.gmra.mxu0 %v296
    %v1275 = vpop.f32.mrf.mxu0
    %v1276 = vadd.f32 %v1079, %v1275
    %v1277 = vpop.f32.mrf.mxu0
    %v1278 = vadd.f32 %v1081, %v1277
    %1279 = vmatprep.mubr.f32.mxu0 %v306
    %1280 = vmatmul.mubr.f32.gmra.mxu0 %v305
    %v1281 = vpop.f32.mrf.mxu0
    %v1282 = vadd.f32 %v1085, %v1281
    %v1283 = vpop.f32.mrf.mxu0
    %v1284 = vadd.f32 %v1087, %v1283
    %1285 = vmatprep.mubr.f32.mxu0 %v315
    %1286 = vmatmul.mubr.f32.gmra.mxu0 %v314
    %v1287 = vpop.f32.mrf.mxu0
    %v1288 = vadd.f32 %v1091, %v1287
    %v1289 = vpop.f32.mrf.mxu0
    %v1290 = vadd.f32 %v1093, %v1289
    %1291 = vmatprep.mubr.f32.mxu0 %v324
    %1292 = vmatmul.mubr.f32.gmra.mxu0 %v323
    %v1293 = vpop.f32.mrf.mxu0
    %v1294 = vadd.f32 %v1097, %v1293
    %v1295 = vpop.f32.mrf.mxu0
    %v1296 = vadd.f32 %v1099, %v1295
    %1297 = vmatprep.mubr.f32.mxu0 %v333
    %1298 = vmatmul.mubr.f32.gmra.mxu0 %v332
    %v1299 = vpop.f32.mrf.mxu0
    %v1300 = vadd.f32 %v1103, %v1299
    %v1301 = vpop.f32.mrf.mxu0
    %v1302 = vadd.f32 %v1105, %v1301
    %1303 = vmatprep.mubr.f32.mxu0 %v342
    %1304 = vmatmul.mubr.f32.gmra.mxu0 %v341
    %v1305 = vpop.f32.mrf.mxu0
    %v1306 = vadd.f32 %v1109, %v1305
    %v1307 = vpop.f32.mrf.mxu0
    %v1308 = vadd.f32 %v1111, %v1307
    %1309 = vmatprep.mubr.f32.mxu0 %v351
    %1310 = vmatmul.mubr.f32.gmra.mxu0 %v350
    %v1311 = vpop.f32.mrf.mxu0
    %v1312 = vadd.f32 %v1115, %v1311
    %v1313 = vpop.f32.mrf.mxu0
    %v1314 = vadd.f32 %v1117, %v1313
    %1315 = vmatprep.mubr.f32.mxu0 %v360
    %1316 = vmatmul.mubr.f32.gmra.mxu0 %v359
    %v1317 = vpop.f32.mrf.mxu0
    %v1318 = vadd.f32 %v1121, %v1317
    %v1319 = vpop.f32.mrf.mxu0
    %v1320 = vadd.f32 %v1123, %v1319
    %1321 = vmatprep.mubr.f32.mxu0 %v369
    %1322 = vmatmul.mubr.f32.gmra.mxu0 %v368
    %v1323 = vpop.f32.mrf.mxu0
    %v1324 = vadd.f32 %v1127, %v1323
    %v1325 = vpop.f32.mrf.mxu0
    %v1326 = vadd.f32 %v1129, %v1325
    %1327 = vmatprep.mubr.f32.mxu0 %v378
    %1328 = vmatmul.mubr.f32.gmra.mxu0 %v377
    %v1329 = vpop.f32.mrf.mxu0
    %v1330 = vadd.f32 %v1133, %v1329
    %v1331 = vpop.f32.mrf.mxu0
    %v1332 = vadd.f32 %v1135, %v1331
    %1333 = vmatprep.mubr.f32.mxu0 %v387
    %1334 = vmatmul.mubr.f32.gmra.mxu0 %v386
    %v1335 = vpop.f32.mrf.mxu0
    %v1336 = vadd.f32 %v1139, %v1335
    %v1337 = vpop.f32.mrf.mxu0
    %v1338 = vadd.f32 %v1141, %v1337
    %1339 = vmatprep.mubr.f32.mxu0 %v396
    %1340 = vmatmul.mubr.f32.gmra.mxu0 %v395
    %v1341 = vpop.f32.mrf.mxu0
    %v1342 = vadd.f32 %v1145, %v1341
    %v1343 = vpop.f32.mrf.mxu0
    %v1344 = vadd.f32 %v1147, %v1343
    %1345 = vmatprep.mubr.f32.mxu0 %v405
    %1346 = vmatmul.mubr.f32.gmra.mxu0 %v404
    %v1347 = vpop.f32.mrf.mxu0
    %v1348 = vadd.f32 %v1151, %v1347
    %v1349 = vpop.f32.mrf.mxu0
    %v1350 = vadd.f32 %v1153, %v1349
    %1351 = vmatprep.mubr.f32.mxu0 %v414
    %1352 = vmatmul.mubr.f32.gmra.mxu0 %v413
    %v1353 = vpop.f32.mrf.mxu0
    %v1354 = vadd.f32 %v1157, %v1353
    %v1355 = vpop.f32.mrf.mxu0
    %v1356 = vadd.f32 %v1159, %v1355
    %1357 = vmatprep.mubr.f32.mxu0 %v423
    %1358 = vmatmul.mubr.f32.gmra.mxu0 %v422
    %v1359 = vpop.f32.mrf.mxu0
    %v1360 = vadd.f32 %v1163, %v1359
    %v1361 = vpop.f32.mrf.mxu0
    %v1362 = vadd.f32 %v1165, %v1361
    %1363 = vmatprep.mubr.f32.mxu0 %v432
    %1364 = vmatmul.mubr.f32.gmra.mxu0 %v431
    %v1365 = vpop.f32.mrf.mxu0
    %v1366 = vadd.f32 %v1169, %v1365
    %v1367 = vpop.f32.mrf.mxu0
    %v1368 = vadd.f32 %v1171, %v1367
    %1369 = vmatprep.mubr.f32.mxu0 %v441
    %1370 = vmatmul.mubr.f32.gmra.mxu0 %v440
    %v1371 = vpop.f32.mrf.mxu0
    %v1372 = vadd.f32 %v1175, %v1371
    %v1373 = vpop.f32.mrf.mxu0
    %v1374 = vadd.f32 %v1177, %v1373
    %1375 = vmatprep.mubr.f32.mxu0 %v450
    %1376 = vmatmul.mubr.f32.gmra.mxu0 %v449
    %v1377 = vpop.f32.mrf.mxu0
    %v1378 = vadd.f32 %v1181, %v1377
    %v1379 = vpop.f32.mrf.mxu0
    %v1380 = vadd.f32 %v1183, %v1379
    %1381 = vmatprep.mubr.f32.mxu0 %v459
    %1382 = vmatmul.mubr.f32.gmra.mxu0 %v458
    %v1383 = vpop.f32.mrf.mxu0
    %v1384 = vadd.f32 %v1187, %v1383
    %v1385 = vpop.f32.mrf.mxu0
    %v1386 = vadd.f32 %v1189, %v1385
    %1387 = vmatprep.mubr.f32.mxu0 %v468
    %1388 = vmatmul.mubr.f32.gmra.mxu0 %v467
    %v1389 = vpop.f32.mrf.mxu0
    %v1390 = vadd.f32 %v1193, %v1389
    %v1391 = vpop.f32.mrf.mxu0
    %v1392 = vadd.f32 %v1195, %v1391
    %1393 = vdwg.mxu0
    %1394 = vmatprep.subr.mxu0 %v695
    %1395 = vmatpush1.msra.mxu0 %v694
    %1396 = vmatprep.subr.mxu0 %v693
    %1397 = vmatpush1.msra.mxu0 %v692
    %1398 = vmatprep.subr.mxu0 %v691
    %1399 = vmatpush1.msra.mxu0 %v690
    %1400 = vmatprep.subr.mxu0 %v689
    %1401 = vmatpush1.msra.mxu0 %v688
    %1402 = vmatprep.subr.mxu0 %v687
    %1403 = vmatpush1.msra.mxu0 %v686
    %1404 = vmatprep.subr.mxu0 %v685
    %1405 = vmatpush1.msra.mxu0 %v684
    %1406 = vmatprep.subr.mxu0 %v683
    %1407 = vmatpush1.msra.mxu0 %v682
    %1408 = vmatprep.subr.mxu0 %v681
    %1409 = vmatpush1.msra.mxu0 %v680
    %1410 = vmatprep.subr.mxu0 %v679
    %1411 = vmatpush1.msra.mxu0 %v678
    %1412 = vmatprep.subr.mxu0 %v677
    %1413 = vmatpush1.msra.mxu0 %v676
    %1414 = vmatprep.subr.mxu0 %v675
    %1415 = vmatpush1.msra.mxu0 %v674
    %1416 = vmatprep.subr.mxu0 %v673
    %1417 = vmatpush1.msra.mxu0 %v672
    %1418 = vmatprep.subr.mxu0 %v671
    %1419 = vmatpush1.msra.mxu0 %v670
    %1420 = vmatprep.subr.mxu0 %v669
    %1421 = vmatpush1.msra.mxu0 %v668
    %1422 = vmatprep.subr.mxu0 %v667
    %1423 = vmatpush1.msra.mxu0 %v666
    %1424 = vmatprep.subr.mxu0 %v665
    %1425 = vmatpush1.msra.mxu0 %v664
    %1426 = vmatprep.subr.mxu0 %v727
    %1427 = vmatpush2.msra.mxu0 %v726
    %1428 = vmatprep.subr.mxu0 %v725
    %1429 = vmatpush2.msra.mxu0 %v724
    %1430 = vmatprep.subr.mxu0 %v723
    %1431 = vmatpush2.msra.mxu0 %v722
    %1432 = vmatprep.subr.mxu0 %v721
    %1433 = vmatpush2.msra.mxu0 %v720
    %1434 = vmatprep.subr.mxu0 %v719
    %1435 = vmatpush2.msra.mxu0 %v718
    %1436 = vmatprep.subr.mxu0 %v717
    %1437 = vmatpush2.msra.mxu0 %v716
    %1438 = vmatprep.subr.mxu0 %v715
    %1439 = vmatpush2.msra.mxu0 %v714
    %1440 = vmatprep.subr.mxu0 %v713
    %1441 = vmatpush2.msra.mxu0 %v712
    %1442 = vmatprep.subr.mxu0 %v711
    %1443 = vmatpush2.msra.mxu0 %v710
    %1444 = vmatprep.subr.mxu0 %v709
    %1445 = vmatpush2.msra.mxu0 %v708
    %1446 = vmatprep.subr.mxu0 %v707
    %1447 = vmatpush2.msra.mxu0 %v706
    %1448 = vmatprep.subr.mxu0 %v705
    %1449 = vmatpush2.msra.mxu0 %v704
    %1450 = vmatprep.subr.mxu0 %v703
    %1451 = vmatpush2.msra.mxu0 %v702
    %1452 = vmatprep.subr.mxu0 %v701
    %1453 = vmatpush2.msra.mxu0 %v700
    %1454 = vmatprep.subr.mxu0 %v699
    %1455 = vmatpush2.msra.mxu0 %v698
    %1456 = vmatprep.subr.mxu0 %v697
    %1457 = vmatpush2.msra.mxu0 %v696
    %1458 = vmatprep.mubr.f32.mxu0 %v281
    %1459 = vmatmul.mubr.f32.gmra.mxu0 %v280
    %v1460 = vpop.f32.mrf.mxu0
    %v1461 = vadd.f32 %v1264, %v1460
    %v1462 = vpop.f32.mrf.mxu0
    %v1463 = vadd.f32 %v1266, %v1462
    %1464 = vmatprep.mubr.f32.mxu0 %v290
    %1465 = vmatmul.mubr.f32.gmra.mxu0 %v289
    %v1466 = vpop.f32.mrf.mxu0
    %v1467 = vadd.f32 %v1270, %v1466
    %v1468 = vpop.f32.mrf.mxu0
    %v1469 = vadd.f32 %v1272, %v1468
    %1470 = vmatprep.mubr.f32.mxu0 %v299
    %1471 = vmatmul.mubr.f32.gmra.mxu0 %v298
    %v1472 = vpop.f32.mrf.mxu0
    %v1473 = vadd.f32 %v1276, %v1472
    %v1474 = vpop.f32.mrf.mxu0
    %v1475 = vadd.f32 %v1278, %v1474
    %1476 = vmatprep.mubr.f32.mxu0 %v308
    %1477 = vmatmul.mubr.f32.gmra.mxu0 %v307
    %v1478 = vpop.f32.mrf.mxu0
    %v1479 = vadd.f32 %v1282, %v1478
    %v1480 = vpop.f32.mrf.mxu0
    %v1481 = vadd.f32 %v1284, %v1480
    %1482 = vmatprep.mubr.f32.mxu0 %v317
    %1483 = vmatmul.mubr.f32.gmra.mxu0 %v316
    %v1484 = vpop.f32.mrf.mxu0
    %v1485 = vadd.f32 %v1288, %v1484
    %v1486 = vpop.f32.mrf.mxu0
    %v1487 = vadd.f32 %v1290, %v1486
    %1488 = vmatprep.mubr.f32.mxu0 %v326
    %1489 = vmatmul.mubr.f32.gmra.mxu0 %v325
    %v1490 = vpop.f32.mrf.mxu0
    %v1491 = vadd.f32 %v1294, %v1490
    %v1492 = vpop.f32.mrf.mxu0
    %v1493 = vadd.f32 %v1296, %v1492
    %1494 = vmatprep.mubr.f32.mxu0 %v335
    %1495 = vmatmul.mubr.f32.gmra.mxu0 %v334
    %v1496 = vpop.f32.mrf.mxu0
    %v1497 = vadd.f32 %v1300, %v1496
    %v1498 = vpop.f32.mrf.mxu0
    %v1499 = vadd.f32 %v1302, %v1498
    %1500 = vmatprep.mubr.f32.mxu0 %v344
    %1501 = vmatmul.mubr.f32.gmra.mxu0 %v343
    %v1502 = vpop.f32.mrf.mxu0
    %v1503 = vadd.f32 %v1306, %v1502
    %v1504 = vpop.f32.mrf.mxu0
    %v1505 = vadd.f32 %v1308, %v1504
    %1506 = vmatprep.mubr.f32.mxu0 %v353
    %1507 = vmatmul.mubr.f32.gmra.mxu0 %v352
    %v1508 = vpop.f32.mrf.mxu0
    %v1509 = vadd.f32 %v1312, %v1508
    %v1510 = vpop.f32.mrf.mxu0
    %v1511 = vadd.f32 %v1314, %v1510
    %1512 = vmatprep.mubr.f32.mxu0 %v362
    %1513 = vmatmul.mubr.f32.gmra.mxu0 %v361
    %v1514 = vpop.f32.mrf.mxu0
    %v1515 = vadd.f32 %v1318, %v1514
    %v1516 = vpop.f32.mrf.mxu0
    %v1517 = vadd.f32 %v1320, %v1516
    %1518 = vmatprep.mubr.f32.mxu0 %v371
    %1519 = vmatmul.mubr.f32.gmra.mxu0 %v370
    %v1520 = vpop.f32.mrf.mxu0
    %v1521 = vadd.f32 %v1324, %v1520
    %v1522 = vpop.f32.mrf.mxu0
    %v1523 = vadd.f32 %v1326, %v1522
    %1524 = vmatprep.mubr.f32.mxu0 %v380
    %1525 = vmatmul.mubr.f32.gmra.mxu0 %v379
    %v1526 = vpop.f32.mrf.mxu0
    %v1527 = vadd.f32 %v1330, %v1526
    %v1528 = vpop.f32.mrf.mxu0
    %v1529 = vadd.f32 %v1332, %v1528
    %1530 = vmatprep.mubr.f32.mxu0 %v389
    %1531 = vmatmul.mubr.f32.gmra.mxu0 %v388
    %v1532 = vpop.f32.mrf.mxu0
    %v1533 = vadd.f32 %v1336, %v1532
    %v1534 = vpop.f32.mrf.mxu0
    %v1535 = vadd.f32 %v1338, %v1534
    %1536 = vmatprep.mubr.f32.mxu0 %v398
    %1537 = vmatmul.mubr.f32.gmra.mxu0 %v397
    %v1538 = vpop.f32.mrf.mxu0
    %v1539 = vadd.f32 %v1342, %v1538
    %v1540 = vpop.f32.mrf.mxu0
    %v1541 = vadd.f32 %v1344, %v1540
    %1542 = vmatprep.mubr.f32.mxu0 %v407
    %1543 = vmatmul.mubr.f32.gmra.mxu0 %v406
    %v1544 = vpop.f32.mrf.mxu0
    %v1545 = vadd.f32 %v1348, %v1544
    %v1546 = vpop.f32.mrf.mxu0
    %v1547 = vadd.f32 %v1350, %v1546
    %1548 = vmatprep.mubr.f32.mxu0 %v416
    %1549 = vmatmul.mubr.f32.gmra.mxu0 %v415
    %v1550 = vpop.f32.mrf.mxu0
    %v1551 = vadd.f32 %v1354, %v1550
    %v1552 = vpop.f32.mrf.mxu0
    %v1553 = vadd.f32 %v1356, %v1552
    %1554 = vmatprep.mubr.f32.mxu0 %v425
    %1555 = vmatmul.mubr.f32.gmra.mxu0 %v424
    %v1556 = vpop.f32.mrf.mxu0
    %v1557 = vadd.f32 %v1360, %v1556
    %v1558 = vpop.f32.mrf.mxu0
    %v1559 = vadd.f32 %v1362, %v1558
    %1560 = vmatprep.mubr.f32.mxu0 %v434
    %1561 = vmatmul.mubr.f32.gmra.mxu0 %v433
    %v1562 = vpop.f32.mrf.mxu0
    %v1563 = vadd.f32 %v1366, %v1562
    %v1564 = vpop.f32.mrf.mxu0
    %v1565 = vadd.f32 %v1368, %v1564
    %1566 = vmatprep.mubr.f32.mxu0 %v443
    %1567 = vmatmul.mubr.f32.gmra.mxu0 %v442
    %v1568 = vpop.f32.mrf.mxu0
    %v1569 = vadd.f32 %v1372, %v1568
    %v1570 = vpop.f32.mrf.mxu0
    %v1571 = vadd.f32 %v1374, %v1570
    %1572 = vmatprep.mubr.f32.mxu0 %v452
    %1573 = vmatmul.mubr.f32.gmra.mxu0 %v451
    %v1574 = vpop.f32.mrf.mxu0
    %v1575 = vadd.f32 %v1378, %v1574
    %v1576 = vpop.f32.mrf.mxu0
    %v1577 = vadd.f32 %v1380, %v1576
    %1578 = vmatprep.mubr.f32.mxu0 %v461
    %1579 = vmatmul.mubr.f32.gmra.mxu0 %v460
    %v1580 = vpop.f32.mrf.mxu0
    %v1581 = vadd.f32 %v1384, %v1580
    %v1582 = vpop.f32.mrf.mxu0
    %v1583 = vadd.f32 %v1386, %v1582
    %1584 = vmatprep.mubr.f32.mxu0 %v470
    %1585 = vmatmul.mubr.f32.gmra.mxu0 %v469
    %v1586 = vpop.f32.mrf.mxu0
    %v1587 = vadd.f32 %v1390, %v1586
    %v1588 = vpop.f32.mrf.mxu0
    %v1589 = vadd.f32 %v1392, %v1588
    %1590 = vdwg.mxu0
    %1591 = vmatprep.subr.mxu0 0.0
    %1592 = vmatpush1.msra.mxu0 0.0
    %1593 = vmatprep.subr.mxu0 0.0
    %1594 = vmatpush1.msra.mxu0 0.0
    %1595 = vmatprep.subr.mxu0 0.0
    %1596 = vmatpush1.msra.mxu0 0.0
    %1597 = vmatprep.subr.mxu0 0.0
    %1598 = vmatpush1.msra.mxu0 0.0
    %1599 = vmatprep.subr.mxu0 0.0
    %1600 = vmatpush1.msra.mxu0 0.0
    %1601 = vmatprep.subr.mxu0 0.0
    %1602 = vmatpush1.msra.mxu0 0.0
    %1603 = vmatprep.subr.mxu0 0.0
    %1604 = vmatpush1.msra.mxu0 0.0
    %1605 = vmatprep.subr.mxu0 0.0
    %1606 = vmatpush1.msra.mxu0 0.0
    %1607 = vmatprep.subr.mxu0 0.0
    %1608 = vmatpush1.msra.mxu0 0.0
    %1609 = vmatprep.subr.mxu0 0.0
    %1610 = vmatpush1.msra.mxu0 0.0
    %1611 = vmatprep.subr.mxu0 0.0
    %1612 = vmatpush1.msra.mxu0 0.0
    %1613 = vmatprep.subr.mxu0 0.0
    %1614 = vmatpush1.msra.mxu0 0.0
    %1615 = vmatprep.subr.mxu0 %v735
    %1616 = vmatpush1.msra.mxu0 %v734
    %1617 = vmatprep.subr.mxu0 %v733
    %1618 = vmatpush1.msra.mxu0 %v732
    %1619 = vmatprep.subr.mxu0 %v731
    %1620 = vmatpush1.msra.mxu0 %v730
    %1621 = vmatprep.subr.mxu0 %v729
    %1622 = vmatpush1.msra.mxu0 %v728
    %1623 = vmatprep.subr.mxu0 0.0
    %1624 = vmatpush2.msra.mxu0 0.0
    %1625 = vmatprep.subr.mxu0 0.0
    %1626 = vmatpush2.msra.mxu0 0.0
    %1627 = vmatprep.subr.mxu0 0.0
    %1628 = vmatpush2.msra.mxu0 0.0
    %1629 = vmatprep.subr.mxu0 0.0
    %1630 = vmatpush2.msra.mxu0 0.0
    %1631 = vmatprep.subr.mxu0 0.0
    %1632 = vmatpush2.msra.mxu0 0.0
    %1633 = vmatprep.subr.mxu0 0.0
    %1634 = vmatpush2.msra.mxu0 0.0
    %1635 = vmatprep.subr.mxu0 0.0
    %1636 = vmatpush2.msra.mxu0 0.0
    %1637 = vmatprep.subr.mxu0 0.0
    %1638 = vmatpush2.msra.mxu0 0.0
    %1639 = vmatprep.subr.mxu0 0.0
    %1640 = vmatpush2.msra.mxu0 0.0
    %1641 = vmatprep.subr.mxu0 0.0
    %1642 = vmatpush2.msra.mxu0 0.0
    %1643 = vmatprep.subr.mxu0 0.0
    %1644 = vmatpush2.msra.mxu0 0.0
    %1645 = vmatprep.subr.mxu0 0.0
    %1646 = vmatpush2.msra.mxu0 0.0
    %1647 = vmatprep.subr.mxu0 0.0
    %1648 = vmatpush2.msra.mxu0 0.0
    %1649 = vmatprep.subr.mxu0 0.0
    %1650 = vmatpush2.msra.mxu0 0.0
    %1651 = vmatprep.subr.mxu0 0.0
    %1652 = vmatpush2.msra.mxu0 0.0
    %1653 = vmatprep.subr.mxu0 0.0
    %1654 = vmatpush2.msra.mxu0 0.0
    %1655 = vmatprep.mubr.f32.mxu0 0.0
    %1656 = vmatmul.mubr.f32.gmra.mxu0 %v738
    %v1657 = vpop.f32.mrf.mxu0
    %v1658 = vadd.f32 %v1461, %v1657
    %v1659 = vpop.f32.mrf.mxu0
    %v1660 = vadd.f32 %v1463, %v1659
    %1661 = vmatprep.mubr.f32.mxu0 0.0
    %1662 = vmatmul.mubr.f32.gmra.mxu0 %v741
    %v1663 = vpop.f32.mrf.mxu0
    %v1664 = vadd.f32 %v1467, %v1663
    %v1665 = vpop.f32.mrf.mxu0
    %v1666 = vadd.f32 %v1469, %v1665
    %1667 = vmatprep.mubr.f32.mxu0 0.0
    %1668 = vmatmul.mubr.f32.gmra.mxu0 %v744
    %v1669 = vpop.f32.mrf.mxu0
    %v1670 = vadd.f32 %v1473, %v1669
    %v1671 = vpop.f32.mrf.mxu0
    %v1672 = vadd.f32 %v1475, %v1671
    %1673 = vmatprep.mubr.f32.mxu0 0.0
    %1674 = vmatmul.mubr.f32.gmra.mxu0 %v747
    %v1675 = vpop.f32.mrf.mxu0
    %v1676 = vadd.f32 %v1479, %v1675
    %v1677 = vpop.f32.mrf.mxu0
    %v1678 = vadd.f32 %v1481, %v1677
    %1679 = vmatprep.mubr.f32.mxu0 0.0
    %1680 = vmatmul.mubr.f32.gmra.mxu0 %v750
    %v1681 = vpop.f32.mrf.mxu0
    %v1682 = vadd.f32 %v1485, %v1681
    %v1683 = vpop.f32.mrf.mxu0
    %v1684 = vadd.f32 %v1487, %v1683
    %1685 = vmatprep.mubr.f32.mxu0 0.0
    %1686 = vmatmul.mubr.f32.gmra.mxu0 %v753
    %v1687 = vpop.f32.mrf.mxu0
    %v1688 = vadd.f32 %v1491, %v1687
    %v1689 = vpop.f32.mrf.mxu0
    %v1690 = vadd.f32 %v1493, %v1689
    %1691 = vmatprep.mubr.f32.mxu0 0.0
    %1692 = vmatmul.mubr.f32.gmra.mxu0 %v756
    %v1693 = vpop.f32.mrf.mxu0
    %v1694 = vadd.f32 %v1497, %v1693
    %v1695 = vpop.f32.mrf.mxu0
    %v1696 = vadd.f32 %v1499, %v1695
    %1697 = vmatprep.mubr.f32.mxu0 0.0
    %1698 = vmatmul.mubr.f32.gmra.mxu0 %v759
    %v1699 = vpop.f32.mrf.mxu0
    %v1700 = vadd.f32 %v1503, %v1699
    %v1701 = vpop.f32.mrf.mxu0
    %v1702 = vadd.f32 %v1505, %v1701
    %1703 = vmatprep.mubr.f32.mxu0 0.0
    %1704 = vmatmul.mubr.f32.gmra.mxu0 %v762
    %v1705 = vpop.f32.mrf.mxu0
    %v1706 = vadd.f32 %v1509, %v1705
    %v1707 = vpop.f32.mrf.mxu0
    %v1708 = vadd.f32 %v1511, %v1707
    %1709 = vmatprep.mubr.f32.mxu0 0.0
    %1710 = vmatmul.mubr.f32.gmra.mxu0 %v765
    %v1711 = vpop.f32.mrf.mxu0
    %v1712 = vadd.f32 %v1515, %v1711
    %v1713 = vpop.f32.mrf.mxu0
    %v1714 = vadd.f32 %v1517, %v1713
    %1715 = vmatprep.mubr.f32.mxu0 0.0
    %1716 = vmatmul.mubr.f32.gmra.mxu0 %v768
    %v1717 = vpop.f32.mrf.mxu0
    %v1718 = vadd.f32 %v1521, %v1717
    %v1719 = vpop.f32.mrf.mxu0
    %v1720 = vadd.f32 %v1523, %v1719
    %1721 = vmatprep.mubr.f32.mxu0 0.0
    %1722 = vmatmul.mubr.f32.gmra.mxu0 %v771
    %v1723 = vpop.f32.mrf.mxu0
    %v1724 = vadd.f32 %v1527, %v1723
    %v1725 = vpop.f32.mrf.mxu0
    %v1726 = vadd.f32 %v1529, %v1725
    %1727 = vmatprep.mubr.f32.mxu0 0.0
    %1728 = vmatmul.mubr.f32.gmra.mxu0 %v774
    %v1729 = vpop.f32.mrf.mxu0
    %v1730 = vadd.f32 %v1533, %v1729
    %v1731 = vpop.f32.mrf.mxu0
    %v1732 = vadd.f32 %v1535, %v1731
    %1733 = vmatprep.mubr.f32.mxu0 0.0
    %1734 = vmatmul.mubr.f32.gmra.mxu0 %v777
    %v1735 = vpop.f32.mrf.mxu0
    %v1736 = vadd.f32 %v1539, %v1735
    %v1737 = vpop.f32.mrf.mxu0
    %v1738 = vadd.f32 %v1541, %v1737
    %1739 = vmatprep.mubr.f32.mxu0 0.0
    %1740 = vmatmul.mubr.f32.gmra.mxu0 %v780
    %v1741 = vpop.f32.mrf.mxu0
    %v1742 = vadd.f32 %v1545, %v1741
    %v1743 = vpop.f32.mrf.mxu0
    %v1744 = vadd.f32 %v1547, %v1743
    %1745 = vmatprep.mubr.f32.mxu0 0.0
    %1746 = vmatmul.mubr.f32.gmra.mxu0 %v783
    %v1747 = vpop.f32.mrf.mxu0
    %v1748 = vadd.f32 %v1551, %v1747
    %v1749 = vpop.f32.mrf.mxu0
    %v1750 = vadd.f32 %v1553, %v1749
    %1751 = vmatprep.mubr.f32.mxu0 0.0
    %1752 = vmatmul.mubr.f32.gmra.mxu0 %v786
    %v1753 = vpop.f32.mrf.mxu0
    %v1754 = vadd.f32 %v1557, %v1753
    %v1755 = vpop.f32.mrf.mxu0
    %v1756 = vadd.f32 %v1559, %v1755
    %1757 = vmatprep.mubr.f32.mxu0 0.0
    %1758 = vmatmul.mubr.f32.gmra.mxu0 %v789
    %v1759 = vpop.f32.mrf.mxu0
    %v1760 = vadd.f32 %v1563, %v1759
    %v1761 = vpop.f32.mrf.mxu0
    %v1762 = vadd.f32 %v1565, %v1761
    %1763 = vmatprep.mubr.f32.mxu0 0.0
    %1764 = vmatmul.mubr.f32.gmra.mxu0 %v792
    %v1765 = vpop.f32.mrf.mxu0
    %v1766 = vadd.f32 %v1569, %v1765
    %v1767 = vpop.f32.mrf.mxu0
    %v1768 = vadd.f32 %v1571, %v1767
    %1769 = vmatprep.mubr.f32.mxu0 0.0
    %1770 = vmatmul.mubr.f32.gmra.mxu0 %v795
    %v1771 = vpop.f32.mrf.mxu0
    %v1772 = vadd.f32 %v1575, %v1771
    %v1773 = vpop.f32.mrf.mxu0
    %v1774 = vadd.f32 %v1577, %v1773
    %1775 = vmatprep.mubr.f32.mxu0 0.0
    %1776 = vmatmul.mubr.f32.gmra.mxu0 %v798
    %v1777 = vpop.f32.mrf.mxu0
    %v1778 = vadd.f32 %v1581, %v1777
    %v1779 = vpop.f32.mrf.mxu0
    %v1780 = vadd.f32 %v1583, %v1779
    %1781 = vmatprep.mubr.f32.mxu0 0.0
    %1782 = vmatmul.mubr.f32.gmra.mxu0 %v801
    %v1783 = vpop.f32.mrf.mxu0
    %v1784 = vadd.f32 %v1587, %v1783
    %v1785 = vpop.f32.mrf.mxu0
    %v1786 = vadd.f32 %v1589, %v1785
    %1787 = vdwg.mxu0
    %1788 = vst [vmem:[#allocation2] sm:$0xff] %v1658
    %vm1789 = vcmask 556032
    %1790 = vst.msk [vmem:[#allocation2 + $0x8] sm:$0xff] %vm1789, %v1660
    %1791 = vst [vmem:[#allocation2 + $0x10] sm:$0xff] %v1664
    %1792 = vst.msk [vmem:[#allocation2 + $0x18] sm:$0xff] %vm1789, %v1666
    %1793 = vst [vmem:[#allocation2 + $0x20] sm:$0xff] %v1670
    %1794 = vst.msk [vmem:[#allocation2 + $0x28] sm:$0xff] %vm1789, %v1672
    %1795 = vst [vmem:[#allocation2 + $0x30] sm:$0xff] %v1676
    %1796 = vst.msk [vmem:[#allocation2 + $0x38] sm:$0xff] %vm1789, %v1678
    %1797 = vst [vmem:[#allocation2 + $0x40] sm:$0xff] %v1682
    %1798 = vst.msk [vmem:[#allocation2 + $0x48] sm:$0xff] %vm1789, %v1684
    %1799 = vst [vmem:[#allocation2 + $0x50] sm:$0xff] %v1688
    %1800 = vst.msk [vmem:[#allocation2 + $0x58] sm:$0xff] %vm1789, %v1690
    %1801 = vst [vmem:[#allocation2 + $0x60] sm:$0xff] %v1694
    %1802 = vst.msk [vmem:[#allocation2 + $0x68] sm:$0xff] %vm1789, %v1696
    %1803 = vst [vmem:[#allocation2 + $0x70] sm:$0xff] %v1700
    %1804 = vst.msk [vmem:[#allocation2 + $0x78] sm:$0xff] %vm1789, %v1702
    %1805 = vst [vmem:[#allocation2 + $0x80] sm:$0xff] %v1706
    %1806 = vst.msk [vmem:[#allocation2 + $0x88] sm:$0xff] %vm1789, %v1708
    %1807 = vst [vmem:[#allocation2 + $0x90] sm:$0xff] %v1712
    %1808 = vst.msk [vmem:[#allocation2 + $0x98] sm:$0xff] %vm1789, %v1714
    %1809 = vst [vmem:[#allocation2 + $0xa0] sm:$0xff] %v1718
    %1810 = vst.msk [vmem:[#allocation2 + $0xa8] sm:$0xff] %vm1789, %v1720
    %1811 = vst [vmem:[#allocation2 + $0xb0] sm:$0xff] %v1724
    %1812 = vst.msk [vmem:[#allocation2 + $0xb8] sm:$0xff] %vm1789, %v1726
    %1813 = vst [vmem:[#allocation2 + $0xc0] sm:$0xff] %v1730
    %1814 = vst.msk [vmem:[#allocation2 + $0xc8] sm:$0xff] %vm1789, %v1732
    %1815 = vst [vmem:[#allocation2 + $0xd0] sm:$0xff] %v1736
    %1816 = vst.msk [vmem:[#allocation2 + $0xd8] sm:$0xff] %vm1789, %v1738
    %1817 = vst [vmem:[#allocation2 + $0xe0] sm:$0xff] %v1742
    %1818 = vst.msk [vmem:[#allocation2 + $0xe8] sm:$0xff] %vm1789, %v1744
    %1819 = vst [vmem:[#allocation2 + $0xf0] sm:$0xff] %v1748
    %1820 = vst.msk [vmem:[#allocation2 + $0xf8] sm:$0xff] %vm1789, %v1750
    %1821 = vst [vmem:[#allocation2 + $0x100] sm:$0xff] %v1754
    %1822 = vst.msk [vmem:[#allocation2 + $0x108] sm:$0xff] %vm1789, %v1756
    %1823 = vst [vmem:[#allocation2 + $0x110] sm:$0xff] %v1760
    %1824 = vst.msk [vmem:[#allocation2 + $0x118] sm:$0xff] %vm1789, %v1762
    %1825 = vst [vmem:[#allocation2 + $0x120] sm:$0xff] %v1766
    %1826 = vst.msk [vmem:[#allocation2 + $0x128] sm:$0xff] %vm1789, %v1768
    %1827 = vst [vmem:[#allocation2 + $0x130] sm:$0xff] %v1772
    %1828 = vst.msk [vmem:[#allocation2 + $0x138] sm:$0xff] %vm1789, %v1774
    %1829 = vst [vmem:[#allocation2 + $0x140] sm:$0xff] %v1778
    %1830 = vst.msk [vmem:[#allocation2 + $0x148] sm:$0xff] %vm1789, %v1780
    %1831 = vst [vmem:[#allocation2 + $0x150] sm:$0xff] %v1784
    %1832 = vst.msk [vmem:[#allocation2 + $0x158] sm:$0xff] %vm1789, %v1786
    // Predicated region
    $region14: #{tpu_custom_call.1} parent=1 // pred_check
      _
    $region15: #{tpu_custom_call.1} parent=1 // pred_check_branch
      %1834 = sbr.rel (0) target = $region17
    $region16: #{tpu_custom_call.1} parent=1 // pred_region
      %s1836 = ssub.s32 5632, 5632
      %1837 = vsyncadd [#allocation3], %s1836
      %s1838 = sshll.u32 [#allocation2], 4
      %s1839 = int_to_ptr.vmem [resolvable:$true] %s1838
      %1844 = dma.vmem_to_hbm [thread:$0]  %s1839, 5632, %s3, [#allocation3], 256, 256, 16
    $region17: #{tpu_custom_call.1} parent=1 // pred_fallthru
      _
    // Predicated region
    $region18: #{tpu_custom_call.1} parent=1 // pred_check
      _
    $region19: #{tpu_custom_call.1} parent=1 // pred_check_branch
      %1846 = sbr.rel (0) target = $region21
    $region20: #{tpu_custom_call.1} parent=1 // pred_region
      %1847 = dma.done [#allocation3], 5632
    $region21: #{tpu_custom_call.1} parent=1 // pred_fallthru
      _
    %1848 = vsyncpa [#allocation3], 1

</llo_original>
